<compile_context>
chip_gen: v6e
topology: v6e:2x2x1
jax: 0.10.0
libtpu: 0.0.40
codegen_flags: <defaults>
</compile_context>

<pallas_src>
import functools

import jax
import jax.numpy as jnp
from jax.experimental import pallas as pl
from jax.experimental.pallas import tpu as pltpu


# ----------------------------------------------------------------------------
# Fused Pallas kernel: tiled GEMM + folded-BN scale/bias + activation epilogue
# ----------------------------------------------------------------------------
def _fused_gemm_kernel(a_ref, b_ref, s_ref, c_ref, o_ref, acc_ref, *,
                       act, affine, k_steps):
    @pl.when(pl.program_id(2) == 0)
    def _init():
        acc_ref[...] = jnp.zeros_like(acc_ref)

    acc_ref[...] += jnp.dot(a_ref[...], b_ref[...],
                            preferred_element_type=jnp.float32)

    @pl.when(pl.program_id(2) == k_steps - 1)
    def _epilogue():
        acc = acc_ref[...]
        if affine:                                   # skip dead FMA when bn=False
            acc = acc * s_ref[...] + c_ref[...]      # (tr,1) broadcast over lanes
        if act == "relu":
            acc = jnp.maximum(acc, 0.0)
        elif act == "leaky":
            acc = jnp.where(acc > 0.0, acc, 0.2 * acc)
        elif act == "tanh":
            acc = jnp.tanh(acc)
        o_ref[...] = acc.astype(o_ref.dtype)


def _pick_tile(dim, pref, align):
    """Largest tile <= pref that divides dim and is a multiple of `align`;
    falls back to the full dim (a full-extent block is always legal)."""
    if dim <= pref:
        return dim
    t = (pref // align) * align
    while t >= align:
        if dim % t == 0:
            return t
        t -= align
    return dim


def _fused_gemm(a, b, scale, bias, act, affine):
    """O[r, m] = act(scale[r] * sum_k A[r,k] B[k,m] + bias[r]); lane-dense (R, M) output."""
    R, K = a.shape
    K2, M = b.shape
    assert K == K2

    tr = _pick_tile(R, 256, 8)        # sublane axis of A / O
    tn = _pick_tile(M, 512, 128)      # lane axis of B / O
    tk = _pick_tile(K, 512, 128)      # contraction axis
    gr, gn, gk = R // tr, M // tn, K // tk

    a16 = a.astype(jnp.bfloat16)
    b16 = b.astype(jnp.bfloat16)
    s2 = scale.reshape(R, 1).astype(jnp.float32)
    c2 = bias.reshape(R, 1).astype(jnp.float32)

    kernel = functools.partial(_fused_gemm_kernel, act=act, affine=affine, k_steps=gk)
    flops = 2 * R * K * M
    bytes_accessed = R * K * 2 + K * M * 2 + R * M * 4 + 2 * R * 4

    return pl.pallas_call(
        kernel,
        out_shape=jax.ShapeDtypeStruct((R, M), jnp.float32),
        grid_spec=pltpu.PrefetchScalarGridSpec(
            num_scalar_prefetch=0,
            grid=(gr, gn, gk),
            in_specs=[
                pl.BlockSpec((tr, tk), lambda i, j, k: (i, k)),   # A
                pl.BlockSpec((tk, tn), lambda i, j, k: (k, j)),   # B
                pl.BlockSpec((tr, 1), lambda i, j, k: (i, 0)),    # scale
                pl.BlockSpec((tr, 1), lambda i, j, k: (i, 0)),    # bias
            ],
            out_specs=pl.BlockSpec((tr, tn), lambda i, j, k: (i, j)),
            scratch_shapes=[pltpu.VMEM((tr, tn), jnp.float32)],
        ),
        compiler_params=pltpu.CompilerParams(
            dimension_semantics=("parallel", "parallel", "arbitrary"),
            vmem_limit_bytes=32 * 1024 * 1024,
        ),
        cost_estimate=pl.CostEstimate(
            flops=flops,
            transcendentals=(R * M if act == "tanh" else 0),
            bytes_accessed=bytes_accessed,
        ),
    )(a16, b16, s2, c2)


# ----------------------------------------------------------------------------
# Conv / ConvTranspose on the fused GEMM.  Activations are CNHW: (C, N, H, W).
# ----------------------------------------------------------------------------
def _im2col_t(xp, KH, KW, stride):
    """Padded CNHW activations -> (K, M) patch matrix with K = KH*KW*Cin on sublanes
    (row order kh, kw, ci) and M = N*OH*OW on lanes.  No activation transposes."""
    C, N, Hp, Wp = xp.shape
    OH = (Hp - KH) // stride + 1
    OW = (Wp - KW) // stride + 1
    rows = []
    for kh in range(KH):
        for kw in range(KW):
            sl = xp[:, :, kh: kh + (OH - 1) * stride + 1: stride,
                          kw: kw + (OW - 1) * stride + 1: stride]
            rows.append(sl.reshape(C, N * OH * OW))
    return jnp.concatenate(rows, axis=0), OH, OW


def conv2d(x, w, scale, bias, act, stride, padding, affine):
    # x: (Cin, N, H, W); w: (Cout, Cin, KH, KW)   [PyTorch Conv2d weight layout]
    Cout, Cin, KH, KW = w.shape
    N = x.shape[1]
    xp = jnp.pad(x, ((0, 0), (0, 0), (padding, padding), (padding, padding)))
    b_mat, OH, OW = _im2col_t(xp, KH, KW, stride)
    a_mat = jnp.transpose(w, (2, 3, 1, 0)).reshape(KH * KW * Cin, Cout).T   # (Cout, K)
    out = _fused_gemm(a_mat, b_mat, scale, bias, act, affine)               # (Cout, M)
    return out.reshape(Cout, N, OH, OW)


def _subpixel_weight_matrix(w):
    """ConvTranspose2d weight (Cin, Cout, 4, 4) -> (4*Cout, 4*Cin) phase-stacked GEMM
    weight.  Rows ordered (phase_a, phase_b, co); cols ordered (tap_row, tap_col, ci)."""
    Cin, Cout = w.shape[:2]
    phase_blocks = []
    for a in range(2):
        for b in range(2):
            taps = []
            for o_r in range(2):
                for o_c in range(2):
                    taps.append(w[:, :, (3 - a) - 2 * o_r, (3 - b) - 2 * o_c])  # (Cin, Cout)
            blk = jnp.stack(taps, axis=0).reshape(4 * Cin, Cout)   # rows (o_r, o_c, ci)
            phase_blocks.append(blk.T)                             # (Cout, 4*Cin)
    return jnp.concatenate(phase_blocks, axis=0)                   # (4*Cout, 4*Cin)


def conv_transpose2d(x, w, scale, bias, act, stride, padding, affine):
    # x: (Cin, N, H, W); w: (Cin, Cout, KH, KW)   [PyTorch ConvTranspose2d weight layout]
    Cin, Cout, KH, KW = w.shape
    _, N, H, W = x.shape

    if stride == 2 and KH == 4 and KW == 4 and padding == 1:
        # Sub-pixel decomposition: out[:, :, 2m+a, 2l+b] is a stride-1 2x2 conv of the
        # 1-padded input with the phase-(a,b) sub-kernel; all 4 phases in ONE GEMM.
        xp = jnp.pad(x, ((0, 0), (0, 0), (1, 1), (1, 1)))
        b_mat, OHp, OWp = _im2col_t(xp, 2, 2, 1)                 # OHp = H+1, OWp = W+1
        a_mat = _subpixel_weight_matrix(w)                       # (4*Cout, 4*Cin)
        out = _fused_gemm(a_mat, b_mat, jnp.tile(scale, 4), jnp.tile(bias, 4),
                          act, affine)                           # (4*Cout, N*(H+1)*(W+1))
        out = out.reshape(2, 2, Cout, N, OHp, OWp)
        p00 = out[0, 0][:, :, 0:H,     0:W]
        p01 = out[0, 1][:, :, 0:H,     1:W + 1]
        p10 = out[1, 0][:, :, 1:H + 1, 0:W]
        p11 = out[1, 1][:, :, 1:H + 1, 1:W + 1]
        rows0 = jnp.stack([p00, p01], axis=-1)                   # (Cout, N, H, W, b)
        rows1 = jnp.stack([p10, p11], axis=-1)
        inter = jnp.stack([rows0, rows1], axis=-2)               # (Cout, N, H, W, a, b)
        return jnp.transpose(inter, (0, 1, 2, 4, 3, 5)).reshape(Cout, N, 2 * H, 2 * W)

    # Generic fallback (used for the stride-1, pad-0 initial layer): zero-dilate the
    # input and run the equivalent forward conv (flipped kernel, swapped channels).
    if stride == 1:
        xd = x
    else:
        Hd = (H - 1) * stride + 1
        Wd = (W - 1) * stride + 1
        xd = jnp.zeros((Cin, N, Hd, Wd), x.dtype).at[:, :, ::stride, ::stride].set(x)
    w_conv = jnp.transpose(w[:, :, ::-1, ::-1], (1, 0, 2, 3))    # (Cout, Cin, KH, KW)
    return conv2d(xd, w_conv, scale, bias, act, 1, KH - 1 - padding, affine)


# ----------------------------------------------------------------------------
# Deterministic parameter construction (DCGAN-style init, eval-mode BN folded)
# ----------------------------------------------------------------------------
def _bn_fold(gamma, beta, mean, var, eps=1e-5):
    scale = gamma / jnp.sqrt(var + eps)
    return scale, beta - mean * scale


def _make_layer(key, kind, cin, cout, k, stride, padding, bn, act):
    kw_, kg_ = jax.random.split(key)
    if kind == "convt":
        w = jax.random.normal(kw_, (cin, cout, k, k), jnp.float32) * 0.02
    else:
        w = jax.random.normal(kw_, (cout, cin, k, k), jnp.float32) * 0.02
    if bn:
        gamma = 1.0 + 0.02 * jax.random.normal(kg_, (cout,), jnp.float32)
        scale, bias = _bn_fold(gamma, jnp.zeros((cout,), jnp.float32),
                               jnp.zeros((cout,), jnp.float32),
                               jnp.ones((cout,), jnp.float32))
    else:
        scale = jnp.ones((cout,), jnp.float32)
        bias = jnp.zeros((cout,), jnp.float32)
    return dict(kind=kind, w=w, scale=scale, bias=bias, act=act,
                stride=stride, padding=padding, affine=bn)


def build_decoder(key, isize, nz, nc, ngf):
    assert isize % 16 == 0, "isize has to be a multiple of 16"
    cngf, tisize = ngf // 2, 4
    while tisize != isize:
        cngf *= 2
        tisize *= 2
    keys = jax.random.split(key, 16)
    ki = 0
    layers = [_make_layer(keys[ki], "convt", nz, cngf, 4, 1, 0, True, "relu")]
    ki += 1
    csize = 4
    while csize < isize // 2:
        layers.append(_make_layer(keys[ki], "convt", cngf, cngf // 2, 4, 2, 1, True, "relu"))
        ki += 1
        cngf //= 2
        csize *= 2
    layers.append(_make_layer(keys[ki], "convt", cngf, nc, 4, 2, 1, False, "tanh"))
    return layers


def build_encoder(key, isize, nz, nc, ndf):
    assert isize % 16 == 0, "isize has to be a multiple of 16"
    keys = jax.random.split(key, 16)
    ki = 0
    layers = [_make_layer(keys[ki], "conv", nc, ndf, 4, 2, 1, False, "leaky")]
    ki += 1
    csize, cndf = isize // 2, ndf
    while csize > 4:
        layers.append(_make_layer(keys[ki], "conv", cndf, cndf * 2, 4, 2, 1, True, "leaky"))
        ki += 1
        cndf *= 2
        csize //= 2
    layers.append(_make_layer(keys[ki], "conv", cndf, nz, 4, 1, 0, False, "none"))
    return layers


def apply_net(layers, x):
    for lyr in layers:
        fn = conv2d if lyr["kind"] == "conv" else conv_transpose2d
        x = fn(x, lyr["w"], lyr["scale"], lyr["bias"], lyr["act"],
               lyr["stride"], lyr["padding"], lyr["affine"])
    return x


# ----------------------------------------------------------------------------
# NetG
# ----------------------------------------------------------------------------
def top3_frequencies(x, ns=3):
    # TODO(synk): `top3_frequencies` is undefined in the reference code; approximated
    # here as the normalized indices of the ns largest rFFT magnitude bins (DC excluded).
    mag = jnp.abs(jnp.fft.rfft(x[:, 0, :], axis=-1))           # (B, L//2+1)
    mag = mag.at[:, 0].set(-jnp.inf)
    _, idx = jax.lax.top_k(mag, ns)
    return idx.astype(jnp.float32) / mag.shape[-1]             # (B, ns)


def build_netg(key, opt):
    k1, k2, k3, k4 = jax.random.split(key, 4)
    return {
        "middle_feature": build_decoder(k1, opt["middle_size"], opt["nz"] + opt["ns"],
                                        opt["middle_ch"], opt["ngf"]),
        "feature": build_encoder(k2, opt["middle_size"], opt["nz"],
                                 opt["middle_ch"], opt["ngf"]),
        "decoder_sig": build_decoder(k3, opt["window_size"], opt["nz"], 2, opt["ngf"]),
        "decoder_xwt": build_decoder(k4, opt["im_size"], opt["nz"], opt["nc"], opt["ngf"]),
    }


def netg_forward(params, z, x):
    # z: (B, nz, 1, 1) NCHW, x: (B, 1, window_size)
    # TODO(synk): torch.cat(z, x_style) in the reference is malformed; interpreted as a
    # channel-dim concat of z with the style vector broadcast to (B, ns, 1, 1).
    x_style = top3_frequencies(x)[:, :, None, None]             # (B, ns, 1, 1)
    inp = jnp.concatenate([z, x_style], axis=1)                 # (B, nz+ns, 1, 1)
    inp = jnp.transpose(inp, (1, 0, 2, 3))                      # -> CNHW, once at entry

    middle_feature = apply_net(params["middle_feature"], inp)   # (middle_ch, B, ms, ms)
    feature = apply_net(params["feature"], middle_feature)      # (nz, B, 1, 1)
    signal = apply_net(params["decoder_sig"], feature)          # (2, B, ws, ws)
    xwt = apply_net(params["decoder_xwt"], feature)             # (nc, B, im, im)

    to_nchw = lambda t: jnp.transpose(t, (1, 0, 2, 3))          # once at exit
    return to_nchw(signal), to_nchw(xwt), to_nchw(feature)


if __name__ == "__main__":
    opt = dict(nz=8, ns=3, middle_ch=4, middle_size=16,
               window_size=16, im_size=16, nc=3, ngf=8, ngpu=1)

    key = jax.random.PRNGKey(0)
    kp, kz, kx = jax.random.split(key, 3)
    params = build_netg(kp, opt)

    B = 2
    z = jax.random.normal(kz, (B, opt["nz"], 1, 1), jnp.float32)
    x = jax.random.normal(kx, (B, 1, opt["window_size"]), jnp.float32)

    fwd = jax.jit(lambda z_, x_: netg_forward(params, z_, x_))
    signal, xwt, feature = fwd(z, x)
    jax.block_until_ready((signal, xwt, feature))

    assert signal.shape == (B, 2, opt["window_size"], opt["window_size"])
    assert xwt.shape == (B, opt["nc"], opt["im_size"], opt["im_size"])
    assert feature.shape == (B, opt["nz"], 1, 1)
    assert jnp.all(jnp.isfinite(signal)) and jnp.all(jnp.isfinite(xwt))
    print("KERNEL_OK")
</pallas_src>

<mosaic_0001>
module attributes {stable_mosaic.version = 11 : i64} {
  func.func @_fused_gemm_kernel(%arg0: i32, %arg1: i32, %arg2: i32, %arg3: memref<16x176xbf16, #tpu.memory_space<vmem>>, %arg4: memref<176x32xbf16, #tpu.memory_space<vmem>>, %arg5: memref<16x1xf32, #tpu.memory_space<vmem>>, %arg6: memref<16x1xf32, #tpu.memory_space<vmem>>, %arg7: memref<16x32xf32, #tpu.memory_space<vmem>>, %arg8: memref<16x32xf32, #tpu.memory_space<vmem>>) attributes {dimension_semantics = [#tpu.dimension_semantics<parallel>, #tpu.dimension_semantics<parallel>, #tpu.dimension_semantics<arbitrary>], iteration_bounds = array<i64: 1, 1, 1>, scalar_prefetch = 0 : i64, scratch_operands = 1 : i64, tpu.core_type = #tpu.core_type<tc>, window_params = [{transform_indices = @transform_0, window_bounds = array<i64: 16, 176>}, {transform_indices = @transform_1, window_bounds = array<i64: 176, 32>}, {transform_indices = @transform_2, window_bounds = array<i64: 16, 1>}, {transform_indices = @transform_3, window_bounds = array<i64: 16, 1>}, {transform_indices = @transform_4, window_bounds = array<i64: 16, 32>}]} {
    %c0_i32 = arith.constant 0 : i32
    %0 = arith.cmpi eq, %arg2, %c0_i32 : i32
    %1 = arith.extui %0 : i1 to i32
    %c0_i32_0 = arith.constant 0 : i32
    %2 = arith.cmpi ne, %1, %c0_i32_0 : i32
    scf.if %2 {
      %cst_10 = arith.constant 0.000000e+00 : f32
      %12 = vector.broadcast %cst_10 : f32 to vector<16x32xf32>
      %c0_11 = arith.constant 0 : index
      %c0_12 = arith.constant 0 : index
      %13 = vector.load %arg8[%c0_11, %c0_12] : memref<16x32xf32, #tpu.memory_space<vmem>>, vector<16x32xf32>
      tpu.vector_store %arg8[%c0_11, %c0_12], %12 {strides = array<i32>} : memref<16x32xf32, #tpu.memory_space<vmem>>, vector<16x32xf32>,
    } else {
    }
    %c0 = arith.constant 0 : index
    %c0_1 = arith.constant 0 : index
    %3 = vector.load %arg8[%c0, %c0_1] : memref<16x32xf32, #tpu.memory_space<vmem>>, vector<16x32xf32>
    %c0_2 = arith.constant 0 : index
    %c0_3 = arith.constant 0 : index
    %4 = vector.load %arg3[%c0_2, %c0_3] : memref<16x176xbf16, #tpu.memory_space<vmem>>, vector<16x176xbf16>
    %c0_4 = arith.constant 0 : index
    %c0_5 = arith.constant 0 : index
    %5 = vector.load %arg4[%c0_4, %c0_5] : memref<176x32xbf16, #tpu.memory_space<vmem>>, vector<176x32xbf16>
    %cst = arith.constant dense<0.000000e+00> : vector<16x32xf32>
    %6 = tpu.matmul %4, %5, %cst {dimension_numbers = #tpu.dot_dimension_numbers<[1], [0], [0], [1], [0, 0, 1, 1], [], []>} : vector<16x176xbf16>, vector<176x32xbf16>, vector<16x32xf32> -> vector<16x32xf32>
    %7 = arith.addf %3, %6 : vector<16x32xf32>
    %c0_6 = arith.constant 0 : index
    %c0_7 = arith.constant 0 : index
    %8 = vector.load %arg8[%c0_6, %c0_7] : memref<16x32xf32, #tpu.memory_space<vmem>>, vector<16x32xf32>
    tpu.vector_store %arg8[%c0_6, %c0_7], %7 {strides = array<i32>} : memref<16x32xf32, #tpu.memory_space<vmem>>, vector<16x32xf32>,
    %c0_i32_8 = arith.constant 0 : i32
    %9 = arith.cmpi eq, %arg2, %c0_i32_8 : i32
    %10 = arith.extui %9 : i1 to i32
    %c0_i32_9 = arith.constant 0 : i32
    %11 = arith.cmpi ne, %10, %c0_i32_9 : i32
    scf.if %11 {
      %c0_10 = arith.constant 0 : index
      %c0_11 = arith.constant 0 : index
      %12 = vector.load %arg8[%c0_10, %c0_11] : memref<16x32xf32, #tpu.memory_space<vmem>>, vector<16x32xf32>
      %c0_12 = arith.constant 0 : index
      %c0_13 = arith.constant 0 : index
      %13 = vector.load %arg5[%c0_12, %c0_13] : memref<16x1xf32, #tpu.memory_space<vmem>>, vector<16x1xf32>
      %14 = vector.broadcast %13 : vector<16x1xf32> to vector<16x32xf32>
      %15 = arith.mulf %12, %14 : vector<16x32xf32>
      %c0_14 = arith.constant 0 : index
      %c0_15 = arith.constant 0 : index
      %16 = vector.load %arg6[%c0_14, %c0_15] : memref<16x1xf32, #tpu.memory_space<vmem>>, vector<16x1xf32>
      %17 = vector.broadcast %16 : vector<16x1xf32> to vector<16x32xf32>
      %18 = arith.addf %15, %17 : vector<16x32xf32>
      %cst_16 = arith.constant 0.000000e+00 : f32
      %19 = vector.broadcast %cst_16 : f32 to vector<16x32xf32>
      %20 = arith.maximumf %18, %19 : vector<16x32xf32>
      %c0_17 = arith.constant 0 : index
      %c0_18 = arith.constant 0 : index
      %21 = vector.load %arg7[%c0_17, %c0_18] : memref<16x32xf32, #tpu.memory_space<vmem>>, vector<16x32xf32>
      tpu.vector_store %arg7[%c0_17, %c0_18], %20 {strides = array<i32>} : memref<16x32xf32, #tpu.memory_space<vmem>>, vector<16x32xf32>,
    } else {
    }
    return
  }
  func.func @transform_0(%arg0: i32, %arg1: i32, %arg2: i32) -> (i32, i32) {
    %c0_i32 = arith.constant 0 : i32
    return %arg0, %arg2 : i32, i32
  }
  func.func @transform_1(%arg0: i32, %arg1: i32, %arg2: i32) -> (i32, i32) {
    %c0_i32 = arith.constant 0 : i32
    return %arg2, %arg1 : i32, i32
  }
  func.func @transform_2(%arg0: i32, %arg1: i32, %arg2: i32) -> (i32, i32) {
    %c0_i32 = arith.constant 0 : i32
    %c0_i32_0 = arith.constant 0 : i32
    return %arg0, %c0_i32 : i32, i32
  }
  func.func @transform_3(%arg0: i32, %arg1: i32, %arg2: i32) -> (i32, i32) {
    %c0_i32 = arith.constant 0 : i32
    %c0_i32_0 = arith.constant 0 : i32
    return %arg0, %c0_i32 : i32, i32
  }
  func.func @transform_4(%arg0: i32, %arg1: i32, %arg2: i32) -> (i32, i32) {
    %c0_i32 = arith.constant 0 : i32
    return %arg0, %arg1 : i32, i32
  }
}

module attributes {stable_mosaic.version = 11 : i64} {
  func.func @_fused_gemm_kernel(%arg0: i32, %arg1: i32, %arg2: i32, %arg3: memref<32x64xbf16, #tpu.memory_space<vmem>>, %arg4: memref<64x50xbf16, #tpu.memory_space<vmem>>, %arg5: memref<32x1xf32, #tpu.memory_space<vmem>>, %arg6: memref<32x1xf32, #tpu.memory_space<vmem>>, %arg7: memref<32x50xf32, #tpu.memory_space<vmem>>, %arg8: memref<32x50xf32, #tpu.memory_space<vmem>>) attributes {dimension_semantics = [#tpu.dimension_semantics<parallel>, #tpu.dimension_semantics<parallel>, #tpu.dimension_semantics<arbitrary>], iteration_bounds = array<i64: 1, 1, 1>, scalar_prefetch = 0 : i64, scratch_operands = 1 : i64, tpu.core_type = #tpu.core_type<tc>, window_params = [{transform_indices = @transform_0, window_bounds = array<i64: 32, 64>}, {transform_indices = @transform_1, window_bounds = array<i64: 64, 50>}, {transform_indices = @transform_2, window_bounds = array<i64: 32, 1>}, {transform_indices = @transform_3, window_bounds = array<i64: 32, 1>}, {transform_indices = @transform_4, window_bounds = array<i64: 32, 50>}]} {
    %c0_i32 = arith.constant 0 : i32
    %0 = arith.cmpi eq, %arg2, %c0_i32 : i32
    %1 = arith.extui %0 : i1 to i32
    %c0_i32_0 = arith.constant 0 : i32
    %2 = arith.cmpi ne, %1, %c0_i32_0 : i32
    scf.if %2 {
      %cst_10 = arith.constant 0.000000e+00 : f32
      %12 = vector.broadcast %cst_10 : f32 to vector<32x50xf32>
      %c0_11 = arith.constant 0 : index
      %c0_12 = arith.constant 0 : index
      %13 = vector.load %arg8[%c0_11, %c0_12] : memref<32x50xf32, #tpu.memory_space<vmem>>, vector<32x50xf32>
      tpu.vector_store %arg8[%c0_11, %c0_12], %12 {strides = array<i32>} : memref<32x50xf32, #tpu.memory_space<vmem>>, vector<32x50xf32>,
    } else {
    }
    %c0 = arith.constant 0 : index
    %c0_1 = arith.constant 0 : index
    %3 = vector.load %arg8[%c0, %c0_1] : memref<32x50xf32, #tpu.memory_space<vmem>>, vector<32x50xf32>
    %c0_2 = arith.constant 0 : index
    %c0_3 = arith.constant 0 : index
    %4 = vector.load %arg3[%c0_2, %c0_3] : memref<32x64xbf16, #tpu.memory_space<vmem>>, vector<32x64xbf16>
    %c0_4 = arith.constant 0 : index
    %c0_5 = arith.constant 0 : index
    %5 = vector.load %arg4[%c0_4, %c0_5] : memref<64x50xbf16, #tpu.memory_space<vmem>>, vector<64x50xbf16>
    %cst = arith.constant dense<0.000000e+00> : vector<32x50xf32>
    %6 = tpu.matmul %4, %5, %cst {dimension_numbers = #tpu.dot_dimension_numbers<[1], [0], [0], [1], [0, 0, 1, 1], [], []>} : vector<32x64xbf16>, vector<64x50xbf16>, vector<32x50xf32> -> vector<32x50xf32>
    %7 = arith.addf %3, %6 : vector<32x50xf32>
    %c0_6 = arith.constant 0 : index
    %c0_7 = arith.constant 0 : index
    %8 = vector.load %arg8[%c0_6, %c0_7] : memref<32x50xf32, #tpu.memory_space<vmem>>, vector<32x50xf32>
    tpu.vector_store %arg8[%c0_6, %c0_7], %7 {strides = array<i32>} : memref<32x50xf32, #tpu.memory_space<vmem>>, vector<32x50xf32>,
    %c0_i32_8 = arith.constant 0 : i32
    %9 = arith.cmpi eq, %arg2, %c0_i32_8 : i32
    %10 = arith.extui %9 : i1 to i32
    %c0_i32_9 = arith.constant 0 : i32
    %11 = arith.cmpi ne, %10, %c0_i32_9 : i32
    scf.if %11 {
      %c0_10 = arith.constant 0 : index
      %c0_11 = arith.constant 0 : index
      %12 = vector.load %arg8[%c0_10, %c0_11] : memref<32x50xf32, #tpu.memory_space<vmem>>, vector<32x50xf32>
      %c0_12 = arith.constant 0 : index
      %c0_13 = arith.constant 0 : index
      %13 = vector.load %arg5[%c0_12, %c0_13] : memref<32x1xf32, #tpu.memory_space<vmem>>, vector<32x1xf32>
      %14 = vector.broadcast %13 : vector<32x1xf32> to vector<32x50xf32>
      %15 = arith.mulf %12, %14 : vector<32x50xf32>
      %c0_14 = arith.constant 0 : index
      %c0_15 = arith.constant 0 : index
      %16 = vector.load %arg6[%c0_14, %c0_15] : memref<32x1xf32, #tpu.memory_space<vmem>>, vector<32x1xf32>
      %17 = vector.broadcast %16 : vector<32x1xf32> to vector<32x50xf32>
      %18 = arith.addf %15, %17 : vector<32x50xf32>
      %cst_16 = arith.constant 0.000000e+00 : f32
      %19 = vector.broadcast %cst_16 : f32 to vector<32x50xf32>
      %20 = arith.maximumf %18, %19 : vector<32x50xf32>
      %c0_17 = arith.constant 0 : index
      %c0_18 = arith.constant 0 : index
      %21 = vector.load %arg7[%c0_17, %c0_18] : memref<32x50xf32, #tpu.memory_space<vmem>>, vector<32x50xf32>
      tpu.vector_store %arg7[%c0_17, %c0_18], %20 {strides = array<i32>} : memref<32x50xf32, #tpu.memory_space<vmem>>, vector<32x50xf32>,
    } else {
    }
    return
  }
  func.func @transform_0(%arg0: i32, %arg1: i32, %arg2: i32) -> (i32, i32) {
    %c0_i32 = arith.constant 0 : i32
    return %arg0, %arg2 : i32, i32
  }
  func.func @transform_1(%arg0: i32, %arg1: i32, %arg2: i32) -> (i32, i32) {
    %c0_i32 = arith.constant 0 : i32
    return %arg2, %arg1 : i32, i32
  }
  func.func @transform_2(%arg0: i32, %arg1: i32, %arg2: i32) -> (i32, i32) {
    %c0_i32 = arith.constant 0 : i32
    %c0_i32_0 = arith.constant 0 : i32
    return %arg0, %c0_i32 : i32, i32
  }
  func.func @transform_3(%arg0: i32, %arg1: i32, %arg2: i32) -> (i32, i32) {
    %c0_i32 = arith.constant 0 : i32
    %c0_i32_0 = arith.constant 0 : i32
    return %arg0, %c0_i32 : i32, i32
  }
  func.func @transform_4(%arg0: i32, %arg1: i32, %arg2: i32) -> (i32, i32) {
    %c0_i32 = arith.constant 0 : i32
    return %arg0, %arg1 : i32, i32
  }
}

module attributes {stable_mosaic.version = 11 : i64} {
  func.func @_fused_gemm_kernel(%arg0: i32, %arg1: i32, %arg2: i32, %arg3: memref<16x32xbf16, #tpu.memory_space<vmem>>, %arg4: memref<32x162xbf16, #tpu.memory_space<vmem>>, %arg5: memref<16x1xf32, #tpu.memory_space<vmem>>, %arg6: memref<16x1xf32, #tpu.memory_space<vmem>>, %arg7: memref<16x162xf32, #tpu.memory_space<vmem>>, %arg8: memref<16x162xf32, #tpu.memory_space<vmem>>) attributes {dimension_semantics = [#tpu.dimension_semantics<parallel>, #tpu.dimension_semantics<parallel>, #tpu.dimension_semantics<arbitrary>], iteration_bounds = array<i64: 1, 1, 1>, scalar_prefetch = 0 : i64, scratch_operands = 1 : i64, tpu.core_type = #tpu.core_type<tc>, window_params = [{transform_indices = @transform_0, window_bounds = array<i64: 16, 32>}, {transform_indices = @transform_1, window_bounds = array<i64: 32, 162>}, {transform_indices = @transform_2, window_bounds = array<i64: 16, 1>}, {transform_indices = @transform_3, window_bounds = array<i64: 16, 1>}, {transform_indices = @transform_4, window_bounds = array<i64: 16, 162>}]} {
    %c0_i32 = arith.constant 0 : i32
    %0 = arith.cmpi eq, %arg2, %c0_i32 : i32
    %1 = arith.extui %0 : i1 to i32
    %c0_i32_0 = arith.constant 0 : i32
    %2 = arith.cmpi ne, %1, %c0_i32_0 : i32
    scf.if %2 {
      %cst_10 = arith.constant 0.000000e+00 : f32
      %12 = vector.broadcast %cst_10 : f32 to vector<16x162xf32>
      %c0_11 = arith.constant 0 : index
      %c0_12 = arith.constant 0 : index
      %13 = vector.load %arg8[%c0_11, %c0_12] : memref<16x162xf32, #tpu.memory_space<vmem>>, vector<16x162xf32>
      tpu.vector_store %arg8[%c0_11, %c0_12], %12 {strides = array<i32>} : memref<16x162xf32, #tpu.memory_space<vmem>>, vector<16x162xf32>,
    } else {
    }
    %c0 = arith.constant 0 : index
    %c0_1 = arith.constant 0 : index
    %3 = vector.load %arg8[%c0, %c0_1] : memref<16x162xf32, #tpu.memory_space<vmem>>, vector<16x162xf32>
    %c0_2 = arith.constant 0 : index
    %c0_3 = arith.constant 0 : index
    %4 = vector.load %arg3[%c0_2, %c0_3] : memref<16x32xbf16, #tpu.memory_space<vmem>>, vector<16x32xbf16>
    %c0_4 = arith.constant 0 : index
    %c0_5 = arith.constant 0 : index
    %5 = vector.load %arg4[%c0_4, %c0_5] : memref<32x162xbf16, #tpu.memory_space<vmem>>, vector<32x162xbf16>
    %cst = arith.constant dense<0.000000e+00> : vector<16x162xf32>
    %6 = tpu.matmul %4, %5, %cst {dimension_numbers = #tpu.dot_dimension_numbers<[1], [0], [0], [1], [0, 0, 1, 1], [], []>} : vector<16x32xbf16>, vector<32x162xbf16>, vector<16x162xf32> -> vector<16x162xf32>
    %7 = arith.addf %3, %6 : vector<16x162xf32>
    %c0_6 = arith.constant 0 : index
    %c0_7 = arith.constant 0 : index
    %8 = vector.load %arg8[%c0_6, %c0_7] : memref<16x162xf32, #tpu.memory_space<vmem>>, vector<16x162xf32>
    tpu.vector_store %arg8[%c0_6, %c0_7], %7 {strides = array<i32>} : memref<16x162xf32, #tpu.memory_space<vmem>>, vector<16x162xf32>,
    %c0_i32_8 = arith.constant 0 : i32
    %9 = arith.cmpi eq, %arg2, %c0_i32_8 : i32
    %10 = arith.extui %9 : i1 to i32
    %c0_i32_9 = arith.constant 0 : i32
    %11 = arith.cmpi ne, %10, %c0_i32_9 : i32
    scf.if %11 {
      %c0_10 = arith.constant 0 : index
      %c0_11 = arith.constant 0 : index
      %12 = vector.load %arg8[%c0_10, %c0_11] : memref<16x162xf32, #tpu.memory_space<vmem>>, vector<16x162xf32>
      %13 = math.tanh %12 : vector<16x162xf32>
      %c0_12 = arith.constant 0 : index
      %c0_13 = arith.constant 0 : index
      %14 = vector.load %arg7[%c0_12, %c0_13] : memref<16x162xf32, #tpu.memory_space<vmem>>, vector<16x162xf32>
      tpu.vector_store %arg7[%c0_12, %c0_13], %13 {strides = array<i32>} : memref<16x162xf32, #tpu.memory_space<vmem>>, vector<16x162xf32>,
    } else {
    }
    return
  }
  func.func @transform_0(%arg0: i32, %arg1: i32, %arg2: i32) -> (i32, i32) {
    %c0_i32 = arith.constant 0 : i32
    return %arg0, %arg2 : i32, i32
  }
  func.func @transform_1(%arg0: i32, %arg1: i32, %arg2: i32) -> (i32, i32) {
    %c0_i32 = arith.constant 0 : i32
    return %arg2, %arg1 : i32, i32
  }
  func.func @transform_2(%arg0: i32, %arg1: i32, %arg2: i32) -> (i32, i32) {
    %c0_i32 = arith.constant 0 : i32
    %c0_i32_0 = arith.constant 0 : i32
    return %arg0, %c0_i32 : i32, i32
  }
  func.func @transform_3(%arg0: i32, %arg1: i32, %arg2: i32) -> (i32, i32) {
    %c0_i32 = arith.constant 0 : i32
    %c0_i32_0 = arith.constant 0 : i32
    return %arg0, %c0_i32 : i32, i32
  }
  func.func @transform_4(%arg0: i32, %arg1: i32, %arg2: i32) -> (i32, i32) {
    %c0_i32 = arith.constant 0 : i32
    return %arg0, %arg1 : i32, i32
  }
}

module attributes {stable_mosaic.version = 11 : i64} {
  func.func @_fused_gemm_kernel(%arg0: i32, %arg1: i32, %arg2: i32, %arg3: memref<8x64xbf16, #tpu.memory_space<vmem>>, %arg4: memref<64x128xbf16, #tpu.memory_space<vmem>>, %arg5: memref<8x1xf32, #tpu.memory_space<vmem>>, %arg6: memref<8x1xf32, #tpu.memory_space<vmem>>, %arg7: memref<8x128xf32, #tpu.memory_space<vmem>>, %arg8: memref<8x128xf32, #tpu.memory_space<vmem>>) attributes {dimension_semantics = [#tpu.dimension_semantics<parallel>, #tpu.dimension_semantics<parallel>, #tpu.dimension_semantics<arbitrary>], iteration_bounds = array<i64: 1, 1, 1>, scalar_prefetch = 0 : i64, scratch_operands = 1 : i64, tpu.core_type = #tpu.core_type<tc>, window_params = [{transform_indices = @transform_0, window_bounds = array<i64: 8, 64>}, {transform_indices = @transform_1, window_bounds = array<i64: 64, 128>}, {transform_indices = @transform_2, window_bounds = array<i64: 8, 1>}, {transform_indices = @transform_3, window_bounds = array<i64: 8, 1>}, {transform_indices = @transform_4, window_bounds = array<i64: 8, 128>}]} {
    %c0_i32 = arith.constant 0 : i32
    %0 = arith.cmpi eq, %arg2, %c0_i32 : i32
    %1 = arith.extui %0 : i1 to i32
    %c0_i32_0 = arith.constant 0 : i32
    %2 = arith.cmpi ne, %1, %c0_i32_0 : i32
    scf.if %2 {
      %cst_10 = arith.constant 0.000000e+00 : f32
      %12 = vector.broadcast %cst_10 : f32 to vector<8x128xf32>
      %c0_11 = arith.constant 0 : index
      %c0_12 = arith.constant 0 : index
      %13 = vector.load %arg8[%c0_11, %c0_12] : memref<8x128xf32, #tpu.memory_space<vmem>>, vector<8x128xf32>
      tpu.vector_store %arg8[%c0_11, %c0_12], %12 {strides = array<i32>} : memref<8x128xf32, #tpu.memory_space<vmem>>, vector<8x128xf32>,
    } else {
    }
    %c0 = arith.constant 0 : index
    %c0_1 = arith.constant 0 : index
    %3 = vector.load %arg8[%c0, %c0_1] : memref<8x128xf32, #tpu.memory_space<vmem>>, vector<8x128xf32>
    %c0_2 = arith.constant 0 : index
    %c0_3 = arith.constant 0 : index
    %4 = vector.load %arg3[%c0_2, %c0_3] : memref<8x64xbf16, #tpu.memory_space<vmem>>, vector<8x64xbf16>
    %c0_4 = arith.constant 0 : index
    %c0_5 = arith.constant 0 : index
    %5 = vector.load %arg4[%c0_4, %c0_5] : memref<64x128xbf16, #tpu.memory_space<vmem>>, vector<64x128xbf16>
    %cst = arith.constant dense<0.000000e+00> : vector<8x128xf32>
    %6 = tpu.matmul %4, %5, %cst {dimension_numbers = #tpu.dot_dimension_numbers<[1], [0], [0], [1], [0, 0, 1, 1], [], []>} : vector<8x64xbf16>, vector<64x128xbf16>, vector<8x128xf32> -> vector<8x128xf32>
    %7 = arith.addf %3, %6 : vector<8x128xf32>
    %c0_6 = arith.constant 0 : index
    %c0_7 = arith.constant 0 : index
    %8 = vector.load %arg8[%c0_6, %c0_7] : memref<8x128xf32, #tpu.memory_space<vmem>>, vector<8x128xf32>
    tpu.vector_store %arg8[%c0_6, %c0_7], %7 {strides = array<i32>} : memref<8x128xf32, #tpu.memory_space<vmem>>, vector<8x128xf32>,
    %c0_i32_8 = arith.constant 0 : i32
    %9 = arith.cmpi eq, %arg2, %c0_i32_8 : i32
    %10 = arith.extui %9 : i1 to i32
    %c0_i32_9 = arith.constant 0 : i32
    %11 = arith.cmpi ne, %10, %c0_i32_9 : i32
    scf.if %11 {
      %c0_10 = arith.constant 0 : index
      %c0_11 = arith.constant 0 : index
      %12 = vector.load %arg8[%c0_10, %c0_11] : memref<8x128xf32, #tpu.memory_space<vmem>>, vector<8x128xf32>
      %cst_12 = arith.constant 0.000000e+00 : f32
      %13 = vector.broadcast %cst_12 : f32 to vector<8x128xf32>
      %14 = arith.cmpf ogt, %12, %13 : vector<8x128xf32>
      %cst_13 = arith.constant 2.000000e-01 : f32
      %15 = vector.broadcast %cst_13 : f32 to vector<8x128xf32>
      %16 = arith.mulf %15, %12 : vector<8x128xf32>
      %17 = arith.select %14, %12, %16 : vector<8x128xi1>, vector<8x128xf32>
      %c0_14 = arith.constant 0 : index
      %c0_15 = arith.constant 0 : index
      %18 = vector.load %arg7[%c0_14, %c0_15] : memref<8x128xf32, #tpu.memory_space<vmem>>, vector<8x128xf32>
      tpu.vector_store %arg7[%c0_14, %c0_15], %17 {strides = array<i32>} : memref<8x128xf32, #tpu.memory_space<vmem>>, vector<8x128xf32>,
    } else {
    }
    return
  }
  func.func @transform_0(%arg0: i32, %arg1: i32, %arg2: i32) -> (i32, i32) {
    %c0_i32 = arith.constant 0 : i32
    return %arg0, %arg2 : i32, i32
  }
  func.func @transform_1(%arg0: i32, %arg1: i32, %arg2: i32) -> (i32, i32) {
    %c0_i32 = arith.constant 0 : i32
    return %arg2, %arg1 : i32, i32
  }
  func.func @transform_2(%arg0: i32, %arg1: i32, %arg2: i32) -> (i32, i32) {
    %c0_i32 = arith.constant 0 : i32
    %c0_i32_0 = arith.constant 0 : i32
    return %arg0, %c0_i32 : i32, i32
  }
  func.func @transform_3(%arg0: i32, %arg1: i32, %arg2: i32) -> (i32, i32) {
    %c0_i32 = arith.constant 0 : i32
    %c0_i32_0 = arith.constant 0 : i32
    return %arg0, %c0_i32 : i32, i32
  }
  func.func @transform_4(%arg0: i32, %arg1: i32, %arg2: i32) -> (i32, i32) {
    %c0_i32 = arith.constant 0 : i32
    return %arg0, %arg1 : i32, i32
  }
}

module attributes {stable_mosaic.version = 11 : i64} {
  func.func @_fused_gemm_kernel(%arg0: i32, %arg1: i32, %arg2: i32, %arg3: memref<16x128xbf16, #tpu.memory_space<vmem>>, %arg4: memref<128x32xbf16, #tpu.memory_space<vmem>>, %arg5: memref<16x1xf32, #tpu.memory_space<vmem>>, %arg6: memref<16x1xf32, #tpu.memory_space<vmem>>, %arg7: memref<16x32xf32, #tpu.memory_space<vmem>>, %arg8: memref<16x32xf32, #tpu.memory_space<vmem>>) attributes {dimension_semantics = [#tpu.dimension_semantics<parallel>, #tpu.dimension_semantics<parallel>, #tpu.dimension_semantics<arbitrary>], iteration_bounds = array<i64: 1, 1, 1>, scalar_prefetch = 0 : i64, scratch_operands = 1 : i64, tpu.core_type = #tpu.core_type<tc>, window_params = [{transform_indices = @transform_0, window_bounds = array<i64: 16, 128>}, {transform_indices = @transform_1, window_bounds = array<i64: 128, 32>}, {transform_indices = @transform_2, window_bounds = array<i64: 16, 1>}, {transform_indices = @transform_3, window_bounds = array<i64: 16, 1>}, {transform_indices = @transform_4, window_bounds = array<i64: 16, 32>}]} {
    %c0_i32 = arith.constant 0 : i32
    %0 = arith.cmpi eq, %arg2, %c0_i32 : i32
    %1 = arith.extui %0 : i1 to i32
    %c0_i32_0 = arith.constant 0 : i32
    %2 = arith.cmpi ne, %1, %c0_i32_0 : i32
    scf.if %2 {
      %cst_10 = arith.constant 0.000000e+00 : f32
      %12 = vector.broadcast %cst_10 : f32 to vector<16x32xf32>
      %c0_11 = arith.constant 0 : index
      %c0_12 = arith.constant 0 : index
      %13 = vector.load %arg8[%c0_11, %c0_12] : memref<16x32xf32, #tpu.memory_space<vmem>>, vector<16x32xf32>
      tpu.vector_store %arg8[%c0_11, %c0_12], %12 {strides = array<i32>} : memref<16x32xf32, #tpu.memory_space<vmem>>, vector<16x32xf32>,
    } else {
    }
    %c0 = arith.constant 0 : index
    %c0_1 = arith.constant 0 : index
    %3 = vector.load %arg8[%c0, %c0_1] : memref<16x32xf32, #tpu.memory_space<vmem>>, vector<16x32xf32>
    %c0_2 = arith.constant 0 : index
    %c0_3 = arith.constant 0 : index
    %4 = vector.load %arg3[%c0_2, %c0_3] : memref<16x128xbf16, #tpu.memory_space<vmem>>, vector<16x128xbf16>
    %c0_4 = arith.constant 0 : index
    %c0_5 = arith.constant 0 : index
    %5 = vector.load %arg4[%c0_4, %c0_5] : memref<128x32xbf16, #tpu.memory_space<vmem>>, vector<128x32xbf16>
    %cst = arith.constant dense<0.000000e+00> : vector<16x32xf32>
    %6 = tpu.matmul %4, %5, %cst {dimension_numbers = #tpu.dot_dimension_numbers<[1], [0], [0], [1], [0, 0, 1, 1], [], []>} : vector<16x128xbf16>, vector<128x32xbf16>, vector<16x32xf32> -> vector<16x32xf32>
    %7 = arith.addf %3, %6 : vector<16x32xf32>
    %c0_6 = arith.constant 0 : index
    %c0_7 = arith.constant 0 : index
    %8 = vector.load %arg8[%c0_6, %c0_7] : memref<16x32xf32, #tpu.memory_space<vmem>>, vector<16x32xf32>
    tpu.vector_store %arg8[%c0_6, %c0_7], %7 {strides = array<i32>} : memref<16x32xf32, #tpu.memory_space<vmem>>, vector<16x32xf32>,
    %c0_i32_8 = arith.constant 0 : i32
    %9 = arith.cmpi eq, %arg2, %c0_i32_8 : i32
    %10 = arith.extui %9 : i1 to i32
    %c0_i32_9 = arith.constant 0 : i32
    %11 = arith.cmpi ne, %10, %c0_i32_9 : i32
    scf.if %11 {
      %c0_10 = arith.constant 0 : index
      %c0_11 = arith.constant 0 : index
      %12 = vector.load %arg8[%c0_10, %c0_11] : memref<16x32xf32, #tpu.memory_space<vmem>>, vector<16x32xf32>
      %c0_12 = arith.constant 0 : index
      %c0_13 = arith.constant 0 : index
      %13 = vector.load %arg5[%c0_12, %c0_13] : memref<16x1xf32, #tpu.memory_space<vmem>>, vector<16x1xf32>
      %14 = vector.broadcast %13 : vector<16x1xf32> to vector<16x32xf32>
      %15 = arith.mulf %12, %14 : vector<16x32xf32>
      %c0_14 = arith.constant 0 : index
      %c0_15 = arith.constant 0 : index
      %16 = vector.load %arg6[%c0_14, %c0_15] : memref<16x1xf32, #tpu.memory_space<vmem>>, vector<16x1xf32>
      %17 = vector.broadcast %16 : vector<16x1xf32> to vector<16x32xf32>
      %18 = arith.addf %15, %17 : vector<16x32xf32>
      %cst_16 = arith.constant 0.000000e+00 : f32
      %19 = vector.broadcast %cst_16 : f32 to vector<16x32xf32>
      %20 = arith.cmpf ogt, %18, %19 : vector<16x32xf32>
      %cst_17 = arith.constant 2.000000e-01 : f32
      %21 = vector.broadcast %cst_17 : f32 to vector<16x32xf32>
      %22 = arith.mulf %21, %18 : vector<16x32xf32>
      %23 = arith.select %20, %18, %22 : vector<16x32xi1>, vector<16x32xf32>
      %c0_18 = arith.constant 0 : index
      %c0_19 = arith.constant 0 : index
      %24 = vector.load %arg7[%c0_18, %c0_19] : memref<16x32xf32, #tpu.memory_space<vmem>>, vector<16x32xf32>
      tpu.vector_store %arg7[%c0_18, %c0_19], %23 {strides = array<i32>} : memref<16x32xf32, #tpu.memory_space<vmem>>, vector<16x32xf32>,
    } else {
    }
    return
  }
  func.func @transform_0(%arg0: i32, %arg1: i32, %arg2: i32) -> (i32, i32) {
    %c0_i32 = arith.constant 0 : i32
    return %arg0, %arg2 : i32, i32
  }
  func.func @transform_1(%arg0: i32, %arg1: i32, %arg2: i32) -> (i32, i32) {
    %c0_i32 = arith.constant 0 : i32
    return %arg2, %arg1 : i32, i32
  }
  func.func @transform_2(%arg0: i32, %arg1: i32, %arg2: i32) -> (i32, i32) {
    %c0_i32 = arith.constant 0 : i32
    %c0_i32_0 = arith.constant 0 : i32
    return %arg0, %c0_i32 : i32, i32
  }
  func.func @transform_3(%arg0: i32, %arg1: i32, %arg2: i32) -> (i32, i32) {
    %c0_i32 = arith.constant 0 : i32
    %c0_i32_0 = arith.constant 0 : i32
    return %arg0, %c0_i32 : i32, i32
  }
  func.func @transform_4(%arg0: i32, %arg1: i32, %arg2: i32) -> (i32, i32) {
    %c0_i32 = arith.constant 0 : i32
    return %arg0, %arg1 : i32, i32
  }
}

module attributes {stable_mosaic.version = 11 : i64} {
  func.func @_fused_gemm_kernel(%arg0: i32, %arg1: i32, %arg2: i32, %arg3: memref<8x256xbf16, #tpu.memory_space<vmem>>, %arg4: memref<256x2xbf16, #tpu.memory_space<vmem>>, %arg5: memref<8x1xf32, #tpu.memory_space<vmem>>, %arg6: memref<8x1xf32, #tpu.memory_space<vmem>>, %arg7: memref<8x2xf32, #tpu.memory_space<vmem>>, %arg8: memref<8x2xf32, #tpu.memory_space<vmem>>) attributes {dimension_semantics = [#tpu.dimension_semantics<parallel>, #tpu.dimension_semantics<parallel>, #tpu.dimension_semantics<arbitrary>], iteration_bounds = array<i64: 1, 1, 1>, scalar_prefetch = 0 : i64, scratch_operands = 1 : i64, tpu.core_type = #tpu.core_type<tc>, window_params = [{transform_indices = @transform_0, window_bounds = array<i64: 8, 256>}, {transform_indices = @transform_1, window_bounds = array<i64: 256, 2>}, {transform_indices = @transform_2, window_bounds = array<i64: 8, 1>}, {transform_indices = @transform_3, window_bounds = array<i64: 8, 1>}, {transform_indices = @transform_4, window_bounds = array<i64: 8, 2>}]} {
    %c0_i32 = arith.constant 0 : i32
    %0 = arith.cmpi eq, %arg2, %c0_i32 : i32
    %1 = arith.extui %0 : i1 to i32
    %c0_i32_0 = arith.constant 0 : i32
    %2 = arith.cmpi ne, %1, %c0_i32_0 : i32
    scf.if %2 {
      %cst_10 = arith.constant 0.000000e+00 : f32
      %12 = vector.broadcast %cst_10 : f32 to vector<8x2xf32>
      %c0_11 = arith.constant 0 : index
      %c0_12 = arith.constant 0 : index
      %13 = vector.load %arg8[%c0_11, %c0_12] : memref<8x2xf32, #tpu.memory_space<vmem>>, vector<8x2xf32>
      tpu.vector_store %arg8[%c0_11, %c0_12], %12 {strides = array<i32>} : memref<8x2xf32, #tpu.memory_space<vmem>>, vector<8x2xf32>,
    } else {
    }
    %c0 = arith.constant 0 : index
    %c0_1 = arith.constant 0 : index
    %3 = vector.load %arg8[%c0, %c0_1] : memref<8x2xf32, #tpu.memory_space<vmem>>, vector<8x2xf32>
    %c0_2 = arith.constant 0 : index
    %c0_3 = arith.constant 0 : index
    %4 = vector.load %arg3[%c0_2, %c0_3] : memref<8x256xbf16, #tpu.memory_space<vmem>>, vector<8x256xbf16>
    %c0_4 = arith.constant 0 : index
    %c0_5 = arith.constant 0 : index
    %5 = vector.load %arg4[%c0_4, %c0_5] : memref<256x2xbf16, #tpu.memory_space<vmem>>, vector<256x2xbf16>
    %cst = arith.constant dense<0.000000e+00> : vector<8x2xf32>
    %6 = tpu.matmul %4, %5, %cst {dimension_numbers = #tpu.dot_dimension_numbers<[1], [0], [0], [1], [0, 0, 1, 1], [], []>} : vector<8x256xbf16>, vector<256x2xbf16>, vector<8x2xf32> -> vector<8x2xf32>
    %7 = arith.addf %3, %6 : vector<8x2xf32>
    %c0_6 = arith.constant 0 : index
    %c0_7 = arith.constant 0 : index
    %8 = vector.load %arg8[%c0_6, %c0_7] : memref<8x2xf32, #tpu.memory_space<vmem>>, vector<8x2xf32>
    tpu.vector_store %arg8[%c0_6, %c0_7], %7 {strides = array<i32>} : memref<8x2xf32, #tpu.memory_space<vmem>>, vector<8x2xf32>,
    %c0_i32_8 = arith.constant 0 : i32
    %9 = arith.cmpi eq, %arg2, %c0_i32_8 : i32
    %10 = arith.extui %9 : i1 to i32
    %c0_i32_9 = arith.constant 0 : i32
    %11 = arith.cmpi ne, %10, %c0_i32_9 : i32
    scf.if %11 {
      %c0_10 = arith.constant 0 : index
      %c0_11 = arith.constant 0 : index
      %12 = vector.load %arg8[%c0_10, %c0_11] : memref<8x2xf32, #tpu.memory_space<vmem>>, vector<8x2xf32>
      %c0_12 = arith.constant 0 : index
      %c0_13 = arith.constant 0 : index
      %13 = vector.load %arg7[%c0_12, %c0_13] : memref<8x2xf32, #tpu.memory_space<vmem>>, vector<8x2xf32>
      tpu.vector_store %arg7[%c0_12, %c0_13], %12 {strides = array<i32>} : memref<8x2xf32, #tpu.memory_space<vmem>>, vector<8x2xf32>,
    } else {
    }
    return
  }
  func.func @transform_0(%arg0: i32, %arg1: i32, %arg2: i32) -> (i32, i32) {
    %c0_i32 = arith.constant 0 : i32
    return %arg0, %arg2 : i32, i32
  }
  func.func @transform_1(%arg0: i32, %arg1: i32, %arg2: i32) -> (i32, i32) {
    %c0_i32 = arith.constant 0 : i32
    return %arg2, %arg1 : i32, i32
  }
  func.func @transform_2(%arg0: i32, %arg1: i32, %arg2: i32) -> (i32, i32) {
    %c0_i32 = arith.constant 0 : i32
    %c0_i32_0 = arith.constant 0 : i32
    return %arg0, %c0_i32 : i32, i32
  }
  func.func @transform_3(%arg0: i32, %arg1: i32, %arg2: i32) -> (i32, i32) {
    %c0_i32 = arith.constant 0 : i32
    %c0_i32_0 = arith.constant 0 : i32
    return %arg0, %c0_i32 : i32, i32
  }
  func.func @transform_4(%arg0: i32, %arg1: i32, %arg2: i32) -> (i32, i32) {
    %c0_i32 = arith.constant 0 : i32
    return %arg0, %arg1 : i32, i32
  }
}

module attributes {stable_mosaic.version = 11 : i64} {
  func.func @_fused_gemm_kernel(%arg0: i32, %arg1: i32, %arg2: i32, %arg3: memref<16x128xbf16, #tpu.memory_space<vmem>>, %arg4: memref<128x32xbf16, #tpu.memory_space<vmem>>, %arg5: memref<16x1xf32, #tpu.memory_space<vmem>>, %arg6: memref<16x1xf32, #tpu.memory_space<vmem>>, %arg7: memref<16x32xf32, #tpu.memory_space<vmem>>, %arg8: memref<16x32xf32, #tpu.memory_space<vmem>>) attributes {dimension_semantics = [#tpu.dimension_semantics<parallel>, #tpu.dimension_semantics<parallel>, #tpu.dimension_semantics<arbitrary>], iteration_bounds = array<i64: 1, 1, 1>, scalar_prefetch = 0 : i64, scratch_operands = 1 : i64, tpu.core_type = #tpu.core_type<tc>, window_params = [{transform_indices = @transform_0, window_bounds = array<i64: 16, 128>}, {transform_indices = @transform_1, window_bounds = array<i64: 128, 32>}, {transform_indices = @transform_2, window_bounds = array<i64: 16, 1>}, {transform_indices = @transform_3, window_bounds = array<i64: 16, 1>}, {transform_indices = @transform_4, window_bounds = array<i64: 16, 32>}]} {
    %c0_i32 = arith.constant 0 : i32
    %0 = arith.cmpi eq, %arg2, %c0_i32 : i32
    %1 = arith.extui %0 : i1 to i32
    %c0_i32_0 = arith.constant 0 : i32
    %2 = arith.cmpi ne, %1, %c0_i32_0 : i32
    scf.if %2 {
      %cst_10 = arith.constant 0.000000e+00 : f32
      %12 = vector.broadcast %cst_10 : f32 to vector<16x32xf32>
      %c0_11 = arith.constant 0 : index
      %c0_12 = arith.constant 0 : index
      %13 = vector.load %arg8[%c0_11, %c0_12] : memref<16x32xf32, #tpu.memory_space<vmem>>, vector<16x32xf32>
      tpu.vector_store %arg8[%c0_11, %c0_12], %12 {strides = array<i32>} : memref<16x32xf32, #tpu.memory_space<vmem>>, vector<16x32xf32>,
    } else {
    }
    %c0 = arith.constant 0 : index
    %c0_1 = arith.constant 0 : index
    %3 = vector.load %arg8[%c0, %c0_1] : memref<16x32xf32, #tpu.memory_space<vmem>>, vector<16x32xf32>
    %c0_2 = arith.constant 0 : index
    %c0_3 = arith.constant 0 : index
    %4 = vector.load %arg3[%c0_2, %c0_3] : memref<16x128xbf16, #tpu.memory_space<vmem>>, vector<16x128xbf16>
    %c0_4 = arith.constant 0 : index
    %c0_5 = arith.constant 0 : index
    %5 = vector.load %arg4[%c0_4, %c0_5] : memref<128x32xbf16, #tpu.memory_space<vmem>>, vector<128x32xbf16>
    %cst = arith.constant dense<0.000000e+00> : vector<16x32xf32>
    %6 = tpu.matmul %4, %5, %cst {dimension_numbers = #tpu.dot_dimension_numbers<[1], [0], [0], [1], [0, 0, 1, 1], [], []>} : vector<16x128xbf16>, vector<128x32xbf16>, vector<16x32xf32> -> vector<16x32xf32>
    %7 = arith.addf %3, %6 : vector<16x32xf32>
    %c0_6 = arith.constant 0 : index
    %c0_7 = arith.constant 0 : index
    %8 = vector.load %arg8[%c0_6, %c0_7] : memref<16x32xf32, #tpu.memory_space<vmem>>, vector<16x32xf32>
    tpu.vector_store %arg8[%c0_6, %c0_7], %7 {strides = array<i32>} : memref<16x32xf32, #tpu.memory_space<vmem>>, vector<16x32xf32>,
    %c0_i32_8 = arith.constant 0 : i32
    %9 = arith.cmpi eq, %arg2, %c0_i32_8 : i32
    %10 = arith.extui %9 : i1 to i32
    %c0_i32_9 = arith.constant 0 : i32
    %11 = arith.cmpi ne, %10, %c0_i32_9 : i32
    scf.if %11 {
      %c0_10 = arith.constant 0 : index
      %c0_11 = arith.constant 0 : index
      %12 = vector.load %arg8[%c0_10, %c0_11] : memref<16x32xf32, #tpu.memory_space<vmem>>, vector<16x32xf32>
      %c0_12 = arith.constant 0 : index
      %c0_13 = arith.constant 0 : index
      %13 = vector.load %arg5[%c0_12, %c0_13] : memref<16x1xf32, #tpu.memory_space<vmem>>, vector<16x1xf32>
      %14 = vector.broadcast %13 : vector<16x1xf32> to vector<16x32xf32>
      %15 = arith.mulf %12, %14 : vector<16x32xf32>
      %c0_14 = arith.constant 0 : index
      %c0_15 = arith.constant 0 : index
      %16 = vector.load %arg6[%c0_14, %c0_15] : memref<16x1xf32, #tpu.memory_space<vmem>>, vector<16x1xf32>
      %17 = vector.broadcast %16 : vector<16x1xf32> to vector<16x32xf32>
      %18 = arith.addf %15, %17 : vector<16x32xf32>
      %cst_16 = arith.constant 0.000000e+00 : f32
      %19 = vector.broadcast %cst_16 : f32 to vector<16x32xf32>
      %20 = arith.maximumf %18, %19 : vector<16x32xf32>
      %c0_17 = arith.constant 0 : index
      %c0_18 = arith.constant 0 : index
      %21 = vector.load %arg7[%c0_17, %c0_18] : memref<16x32xf32, #tpu.memory_space<vmem>>, vector<16x32xf32>
      tpu.vector_store %arg7[%c0_17, %c0_18], %20 {strides = array<i32>} : memref<16x32xf32, #tpu.memory_space<vmem>>, vector<16x32xf32>,
    } else {
    }
    return
  }
  func.func @transform_0(%arg0: i32, %arg1: i32, %arg2: i32) -> (i32, i32) {
    %c0_i32 = arith.constant 0 : i32
    return %arg0, %arg2 : i32, i32
  }
  func.func @transform_1(%arg0: i32, %arg1: i32, %arg2: i32) -> (i32, i32) {
    %c0_i32 = arith.constant 0 : i32
    return %arg2, %arg1 : i32, i32
  }
  func.func @transform_2(%arg0: i32, %arg1: i32, %arg2: i32) -> (i32, i32) {
    %c0_i32 = arith.constant 0 : i32
    %c0_i32_0 = arith.constant 0 : i32
    return %arg0, %c0_i32 : i32, i32
  }
  func.func @transform_3(%arg0: i32, %arg1: i32, %arg2: i32) -> (i32, i32) {
    %c0_i32 = arith.constant 0 : i32
    %c0_i32_0 = arith.constant 0 : i32
    return %arg0, %c0_i32 : i32, i32
  }
  func.func @transform_4(%arg0: i32, %arg1: i32, %arg2: i32) -> (i32, i32) {
    %c0_i32 = arith.constant 0 : i32
    return %arg0, %arg1 : i32, i32
  }
}

module attributes {stable_mosaic.version = 11 : i64} {
  func.func @_fused_gemm_kernel(%arg0: i32, %arg1: i32, %arg2: i32, %arg3: memref<12x32xbf16, #tpu.memory_space<vmem>>, %arg4: memref<32x162xbf16, #tpu.memory_space<vmem>>, %arg5: memref<12x1xf32, #tpu.memory_space<vmem>>, %arg6: memref<12x1xf32, #tpu.memory_space<vmem>>, %arg7: memref<12x162xf32, #tpu.memory_space<vmem>>, %arg8: memref<12x162xf32, #tpu.memory_space<vmem>>) attributes {dimension_semantics = [#tpu.dimension_semantics<parallel>, #tpu.dimension_semantics<parallel>, #tpu.dimension_semantics<arbitrary>], iteration_bounds = array<i64: 1, 1, 1>, scalar_prefetch = 0 : i64, scratch_operands = 1 : i64, tpu.core_type = #tpu.core_type<tc>, window_params = [{transform_indices = @transform_0, window_bounds = array<i64: 12, 32>}, {transform_indices = @transform_1, window_bounds = array<i64: 32, 162>}, {transform_indices = @transform_2, window_bounds = array<i64: 12, 1>}, {transform_indices = @transform_3, window_bounds = array<i64: 12, 1>}, {transform_indices = @transform_4, window_bounds = array<i64: 12, 162>}]} {
    %c0_i32 = arith.constant 0 : i32
    %0 = arith.cmpi eq, %arg2, %c0_i32 : i32
    %1 = arith.extui %0 : i1 to i32
    %c0_i32_0 = arith.constant 0 : i32
    %2 = arith.cmpi ne, %1, %c0_i32_0 : i32
    scf.if %2 {
      %cst_10 = arith.constant 0.000000e+00 : f32
      %12 = vector.broadcast %cst_10 : f32 to vector<12x162xf32>
      %c0_11 = arith.constant 0 : index
      %c0_12 = arith.constant 0 : index
      %13 = vector.load %arg8[%c0_11, %c0_12] : memref<12x162xf32, #tpu.memory_space<vmem>>, vector<12x162xf32>
      tpu.vector_store %arg8[%c0_11, %c0_12], %12 {strides = array<i32>} : memref<12x162xf32, #tpu.memory_space<vmem>>, vector<12x162xf32>,
    } else {
    }
    %c0 = arith.constant 0 : index
    %c0_1 = arith.constant 0 : index
    %3 = vector.load %arg8[%c0, %c0_1] : memref<12x162xf32, #tpu.memory_space<vmem>>, vector<12x162xf32>
    %c0_2 = arith.constant 0 : index
    %c0_3 = arith.constant 0 : index
    %4 = vector.load %arg3[%c0_2, %c0_3] : memref<12x32xbf16, #tpu.memory_space<vmem>>, vector<12x32xbf16>
    %c0_4 = arith.constant 0 : index
    %c0_5 = arith.constant 0 : index
    %5 = vector.load %arg4[%c0_4, %c0_5] : memref<32x162xbf16, #tpu.memory_space<vmem>>, vector<32x162xbf16>
    %cst = arith.constant dense<0.000000e+00> : vector<12x162xf32>
    %6 = tpu.matmul %4, %5, %cst {dimension_numbers = #tpu.dot_dimension_numbers<[1], [0], [0], [1], [0, 0, 1, 1], [], []>} : vector<12x32xbf16>, vector<32x162xbf16>, vector<12x162xf32> -> vector<12x162xf32>
    %7 = arith.addf %3, %6 : vector<12x162xf32>
    %c0_6 = arith.constant 0 : index
    %c0_7 = arith.constant 0 : index
    %8 = vector.load %arg8[%c0_6, %c0_7] : memref<12x162xf32, #tpu.memory_space<vmem>>, vector<12x162xf32>
    tpu.vector_store %arg8[%c0_6, %c0_7], %7 {strides = array<i32>} : memref<12x162xf32, #tpu.memory_space<vmem>>, vector<12x162xf32>,
    %c0_i32_8 = arith.constant 0 : i32
    %9 = arith.cmpi eq, %arg2, %c0_i32_8 : i32
    %10 = arith.extui %9 : i1 to i32
    %c0_i32_9 = arith.constant 0 : i32
    %11 = arith.cmpi ne, %10, %c0_i32_9 : i32
    scf.if %11 {
      %c0_10 = arith.constant 0 : index
      %c0_11 = arith.constant 0 : index
      %12 = vector.load %arg8[%c0_10, %c0_11] : memref<12x162xf32, #tpu.memory_space<vmem>>, vector<12x162xf32>
      %13 = math.tanh %12 : vector<12x162xf32>
      %c0_12 = arith.constant 0 : index
      %c0_13 = arith.constant 0 : index
      %14 = vector.load %arg7[%c0_12, %c0_13] : memref<12x162xf32, #tpu.memory_space<vmem>>, vector<12x162xf32>
      tpu.vector_store %arg7[%c0_12, %c0_13], %13 {strides = array<i32>} : memref<12x162xf32, #tpu.memory_space<vmem>>, vector<12x162xf32>,
    } else {
    }
    return
  }
  func.func @transform_0(%arg0: i32, %arg1: i32, %arg2: i32) -> (i32, i32) {
    %c0_i32 = arith.constant 0 : i32
    return %arg0, %arg2 : i32, i32
  }
  func.func @transform_1(%arg0: i32, %arg1: i32, %arg2: i32) -> (i32, i32) {
    %c0_i32 = arith.constant 0 : i32
    return %arg2, %arg1 : i32, i32
  }
  func.func @transform_2(%arg0: i32, %arg1: i32, %arg2: i32) -> (i32, i32) {
    %c0_i32 = arith.constant 0 : i32
    %c0_i32_0 = arith.constant 0 : i32
    return %arg0, %c0_i32 : i32, i32
  }
  func.func @transform_3(%arg0: i32, %arg1: i32, %arg2: i32) -> (i32, i32) {
    %c0_i32 = arith.constant 0 : i32
    %c0_i32_0 = arith.constant 0 : i32
    return %arg0, %c0_i32 : i32, i32
  }
  func.func @transform_4(%arg0: i32, %arg1: i32, %arg2: i32) -> (i32, i32) {
    %c0_i32 = arith.constant 0 : i32
    return %arg0, %arg1 : i32, i32
  }
}

module attributes {stable_mosaic.version = 11 : i64} {
  func.func @_fused_gemm_kernel(%arg0: i32, %arg1: i32, %arg2: i32, %arg3: memref<8x32xbf16, #tpu.memory_space<vmem>>, %arg4: memref<32x162xbf16, #tpu.memory_space<vmem>>, %arg5: memref<8x1xf32, #tpu.memory_space<vmem>>, %arg6: memref<8x1xf32, #tpu.memory_space<vmem>>, %arg7: memref<8x162xf32, #tpu.memory_space<vmem>>, %arg8: memref<8x162xf32, #tpu.memory_space<vmem>>) attributes {dimension_semantics = [#tpu.dimension_semantics<parallel>, #tpu.dimension_semantics<parallel>, #tpu.dimension_semantics<arbitrary>], iteration_bounds = array<i64: 1, 1, 1>, scalar_prefetch = 0 : i64, scratch_operands = 1 : i64, tpu.core_type = #tpu.core_type<tc>, window_params = [{transform_indices = @transform_0, window_bounds = array<i64: 8, 32>}, {transform_indices = @transform_1, window_bounds = array<i64: 32, 162>}, {transform_indices = @transform_2, window_bounds = array<i64: 8, 1>}, {transform_indices = @transform_3, window_bounds = array<i64: 8, 1>}, {transform_indices = @transform_4, window_bounds = array<i64: 8, 162>}]} {
    %c0_i32 = arith.constant 0 : i32
    %0 = arith.cmpi eq, %arg2, %c0_i32 : i32
    %1 = arith.extui %0 : i1 to i32
    %c0_i32_0 = arith.constant 0 : i32
    %2 = arith.cmpi ne, %1, %c0_i32_0 : i32
    scf.if %2 {
      %cst_10 = arith.constant 0.000000e+00 : f32
      %12 = vector.broadcast %cst_10 : f32 to vector<8x162xf32>
      %c0_11 = arith.constant 0 : index
      %c0_12 = arith.constant 0 : index
      %13 = vector.load %arg8[%c0_11, %c0_12] : memref<8x162xf32, #tpu.memory_space<vmem>>, vector<8x162xf32>
      tpu.vector_store %arg8[%c0_11, %c0_12], %12 {strides = array<i32>} : memref<8x162xf32, #tpu.memory_space<vmem>>, vector<8x162xf32>,
    } else {
    }
    %c0 = arith.constant 0 : index
    %c0_1 = arith.constant 0 : index
    %3 = vector.load %arg8[%c0, %c0_1] : memref<8x162xf32, #tpu.memory_space<vmem>>, vector<8x162xf32>
    %c0_2 = arith.constant 0 : index
    %c0_3 = arith.constant 0 : index
    %4 = vector.load %arg3[%c0_2, %c0_3] : memref<8x32xbf16, #tpu.memory_space<vmem>>, vector<8x32xbf16>
    %c0_4 = arith.constant 0 : index
    %c0_5 = arith.constant 0 : index
    %5 = vector.load %arg4[%c0_4, %c0_5] : memref<32x162xbf16, #tpu.memory_space<vmem>>, vector<32x162xbf16>
    %cst = arith.constant dense<0.000000e+00> : vector<8x162xf32>
    %6 = tpu.matmul %4, %5, %cst {dimension_numbers = #tpu.dot_dimension_numbers<[1], [0], [0], [1], [0, 0, 1, 1], [], []>} : vector<8x32xbf16>, vector<32x162xbf16>, vector<8x162xf32> -> vector<8x162xf32>
    %7 = arith.addf %3, %6 : vector<8x162xf32>
    %c0_6 = arith.constant 0 : index
    %c0_7 = arith.constant 0 : index
    %8 = vector.load %arg8[%c0_6, %c0_7] : memref<8x162xf32, #tpu.memory_space<vmem>>, vector<8x162xf32>
    tpu.vector_store %arg8[%c0_6, %c0_7], %7 {strides = array<i32>} : memref<8x162xf32, #tpu.memory_space<vmem>>, vector<8x162xf32>,
    %c0_i32_8 = arith.constant 0 : i32
    %9 = arith.cmpi eq, %arg2, %c0_i32_8 : i32
    %10 = arith.extui %9 : i1 to i32
    %c0_i32_9 = arith.constant 0 : i32
    %11 = arith.cmpi ne, %10, %c0_i32_9 : i32
    scf.if %11 {
      %c0_10 = arith.constant 0 : index
      %c0_11 = arith.constant 0 : index
      %12 = vector.load %arg8[%c0_10, %c0_11] : memref<8x162xf32, #tpu.memory_space<vmem>>, vector<8x162xf32>
      %13 = math.tanh %12 : vector<8x162xf32>
      %c0_12 = arith.constant 0 : index
      %c0_13 = arith.constant 0 : index
      %14 = vector.load %arg7[%c0_12, %c0_13] : memref<8x162xf32, #tpu.memory_space<vmem>>, vector<8x162xf32>
      tpu.vector_store %arg7[%c0_12, %c0_13], %13 {strides = array<i32>} : memref<8x162xf32, #tpu.memory_space<vmem>>, vector<8x162xf32>,
    } else {
    }
    return
  }
  func.func @transform_0(%arg0: i32, %arg1: i32, %arg2: i32) -> (i32, i32) {
    %c0_i32 = arith.constant 0 : i32
    return %arg0, %arg2 : i32, i32
  }
  func.func @transform_1(%arg0: i32, %arg1: i32, %arg2: i32) -> (i32, i32) {
    %c0_i32 = arith.constant 0 : i32
    return %arg2, %arg1 : i32, i32
  }
  func.func @transform_2(%arg0: i32, %arg1: i32, %arg2: i32) -> (i32, i32) {
    %c0_i32 = arith.constant 0 : i32
    %c0_i32_0 = arith.constant 0 : i32
    return %arg0, %c0_i32 : i32, i32
  }
  func.func @transform_3(%arg0: i32, %arg1: i32, %arg2: i32) -> (i32, i32) {
    %c0_i32 = arith.constant 0 : i32
    %c0_i32_0 = arith.constant 0 : i32
    return %arg0, %c0_i32 : i32, i32
  }
  func.func @transform_4(%arg0: i32, %arg1: i32, %arg2: i32) -> (i32, i32) {
    %c0_i32 = arith.constant 0 : i32
    return %arg0, %arg1 : i32, i32
  }
}

</mosaic_0001>

<llo_original>
// kernel: tile.22
$region0: #{tile.22}
  #allocation0 [shape = 's32[1]{0}', space=sflag, size = 0x4, scoped, tag = 'scoped memory for tile.22']
  %s0 = inlined_call_operand.vmem [shape: f32[8], index: 0, kind: input, shape index: {}]
  %s1 = inlined_call_operand.vmem [shape: f32[4,8], index: 1, kind: output, shape index: {}]
  // Predicated region
  $region2: #{tile.22} parent=0 // pred_check
    _
  $region3: #{tile.22} parent=0 // pred_check_branch
    %3 = sbr.rel (0) target = $region5
  $region4: #{tile.22} parent=0 // pred_region
    _
  $region5: #{tile.22} parent=0 // pred_fallthru
    _
  %v4 = vld [vmem:[%s0] ss:$0 sm:$0xff]
  %5 = vst [vmem:[%s1] sm:$0xf] %v4

// kernel: tile.2
$region0: #{tile.2}
  %s0 = inlined_call_operand.vmem [shape: f32[4,8], index: 0, kind: input, shape index: {}]
  %s1 = inlined_call_operand.vmem [shape: f32[32,1], index: 1, kind: output, shape index: {}]
  $region1: #{tile.2} parent=0
    #allocation0 [shape = 'u8[4096]{0}', space=vmem, size = 0x1000, scoped, tag = 'scoped mem for input reshape']
    %s3 = sshll.u32 1, 4
    %s4 = ssub.s32 %s3, 1
    %v5 = vld [vmem:[%s0] sm:%s4]
    %6 = vst [vmem:[#allocation0] sm:%s4] %v5
    %v7 = vld [vmem:[#allocation0] sm:$0xf]
    %vm8 = vcmask 7168
    %9 = vst.msk [vmem:[%s1] ss:$8 sm:$0xf] %vm8, %v7
    %v10 = vld [vmem:[#allocation0] sm:$0xf]
    %11 = vrot.lane.b32.xlu0 %v10, 127
    %v12 = vpop.permute.xlu0 %11
    %vm13 = vcmask 7168
    %s14 = scalar_lea.vmem %s1, 1
    %15 = vst.msk [vmem:[%s14] ss:$8 sm:$0xf] %vm13, %v12
    %v16 = vld [vmem:[#allocation0] sm:$0xf]
    %17 = vrot.lane.b32.xlu0 %v16, 126
    %v18 = vpop.permute.xlu0 %17
    %vm19 = vcmask 7168
    %s20 = scalar_lea.vmem %s1, 2
    %21 = vst.msk [vmem:[%s20] ss:$8 sm:$0xf] %vm19, %v18
    %v22 = vld [vmem:[#allocation0] sm:$0xf]
    %23 = vrot.lane.b32.xlu0 %v22, 125
    %v24 = vpop.permute.xlu0 %23
    %vm25 = vcmask 7168
    %s26 = scalar_lea.vmem %s1, 3
    %27 = vst.msk [vmem:[%s26] ss:$8 sm:$0xf] %vm25, %v24
    %v28 = vld [vmem:[#allocation0] sm:$0xf]
    %29 = vrot.lane.b32.xlu0 %v28, 124
    %v30 = vpop.permute.xlu0 %29
    %vm31 = vcmask 7168
    %s32 = scalar_lea.vmem %s1, 4
    %33 = vst.msk [vmem:[%s32] ss:$8 sm:$0xf] %vm31, %v30
    %v34 = vld [vmem:[#allocation0] sm:$0xf]
    %35 = vrot.lane.b32.xlu0 %v34, 123
    %v36 = vpop.permute.xlu0 %35
    %vm37 = vcmask 7168
    %s38 = scalar_lea.vmem %s1, 5
    %39 = vst.msk [vmem:[%s38] ss:$8 sm:$0xf] %vm37, %v36
    %v40 = vld [vmem:[#allocation0] sm:$0xf]
    %41 = vrot.lane.b32.xlu0 %v40, 122
    %v42 = vpop.permute.xlu0 %41
    %vm43 = vcmask 7168
    %s44 = scalar_lea.vmem %s1, 6
    %45 = vst.msk [vmem:[%s44] ss:$8 sm:$0xf] %vm43, %v42
    %v46 = vld [vmem:[#allocation0] sm:$0xf]
    %47 = vrot.lane.b32.xlu0 %v46, 121
    %v48 = vpop.permute.xlu0 %47
    %vm49 = vcmask 7168
    %s50 = scalar_lea.vmem %s1, 7
    %51 = vst.msk [vmem:[%s50] ss:$8 sm:$0xf] %vm49, %v48

// kernel: _lambda_.13
$region0: #{_lambda_.13}
  #allocation0 [shape = 'u32[]', space=smem, size = 0x4, offset = 0x4, fixed_abs, tag = 'smem constant byte address 0x4 - core index']
  #allocation1 [shape = 'u32[144,128]{1,0:T(1,128)}', space=vmem, size = 0x12000, scoped, tag = 'internal scratch']
  #allocation2 [shape = 'f32[32,50]{1,0:T(8,128)}', space=vmem, size = 0x4000, scoped, tag = 'scratch operand']
  %s0 = inlined_call_operand.vmem [shape: bf16[32,64], index: 0, kind: input, shape index: {}]
  %s1 = inlined_call_operand.vmem [shape: bf16[64,50], index: 1, kind: input, shape index: {}]
  %s2 = inlined_call_operand.vmem [shape: f32[32,1], index: 2, kind: input, shape index: {}]
  %s3 = inlined_call_operand.vmem [shape: f32[32,1], index: 3, kind: input, shape index: {}]
  %s4 = inlined_call_operand.vmem [shape: f32[32,50], index: 4, kind: output, shape index: {}]
  %s5 = sld [smem:[#allocation0]]
  $region34: #{_lambda_.13} parent=0
    _
  %s7 = ssub.s32 1, %s5
  %s8 = scalar_select 0, %s7, %s5
  // Predicated region
  $region2: #{_lambda_.13} parent=0 // pred_check
    _
  $region3: #{_lambda_.13} parent=0 // pred_check_branch
    %10 = sbr.rel (0) target = $region5
  $region4: #{_lambda_.13} parent=0 // pred_region
    _
  $region5: #{_lambda_.13} parent=0 // pred_fallthru
    _
  // Predicated region
  $region6: #{_lambda_.13} parent=0 // pred_check
    _
  $region7: #{_lambda_.13} parent=0 // pred_check_branch
    %12 = sbr.rel (0) target = $region9
  $region8: #{_lambda_.13} parent=0 // pred_region
    _
  $region9: #{_lambda_.13} parent=0 // pred_fallthru
    _
  // Predicated region
  $region10: #{_lambda_.13} parent=0 // pred_check
    _
  $region11: #{_lambda_.13} parent=0 // pred_check_branch
    %14 = sbr.rel (0) target = $region13
  $region12: #{_lambda_.13} parent=0 // pred_region
    _
  $region13: #{_lambda_.13} parent=0 // pred_fallthru
    _
  // Predicated region
  $region14: #{_lambda_.13} parent=0 // pred_check
    _
  $region15: #{_lambda_.13} parent=0 // pred_check_branch
    %16 = sbr.rel (0) target = $region17
  $region16: #{_lambda_.13} parent=0 // pred_region
    _
  $region17: #{_lambda_.13} parent=0 // pred_fallthru
    _
  %p18 = scmp.eq.s32.totalorder 0, 0
  // Predicated region
  $region18: #{_lambda_.13} parent=0 // pred_check
    %p19 = pneg %p18
  $region19: #{_lambda_.13} parent=0 // pred_check_branch
    %21 = sbr.rel (%p19) target = $region21
  $region20: #{_lambda_.13} parent=0 // pred_region
    %vm22 = vcmask 408576
    %23 = vst.msk [vmem:[#allocation2] sm:$0xff] %vm22, 0.0
    %24 = vst.msk [vmem:[#allocation2 + $0x8] sm:$0xff] %vm22, 0.0
    %25 = vst.msk [vmem:[#allocation2 + $0x10] sm:$0xff] %vm22, 0.0
    %26 = vst.msk [vmem:[#allocation2 + $0x18] sm:$0xff] %vm22, 0.0
  $region21: #{_lambda_.13} parent=0 // pred_fallthru
    _
  %v27 = vld [vmem:[#allocation2] sm:$0xff]
  %v28 = vld [vmem:[#allocation2 + $0x8] sm:$0xff]
  %v29 = vld [vmem:[#allocation2 + $0x10] sm:$0xff]
  %v30 = vld [vmem:[#allocation2 + $0x18] sm:$0xff]
  %v31 = vld [vmem:[%s0] sm:$0xf]
  %v32 = vld [vmem:[%s0 + $0x4] sm:$0xf]
  %v33 = vld [vmem:[%s0 + $0x8] sm:$0xf]
  %v34 = vld [vmem:[%s0 + $0xc] sm:$0xf]
  %v35 = vld [vmem:[%s1] sm:$0xf]
  %v36 = vld [vmem:[%s1 + $0x4] sm:$0xf]
  %v37 = vld [vmem:[%s1 + $0x8] sm:$0xf]
  %v38 = vld [vmem:[%s1 + $0xc] sm:$0xf]
  %v39 = vld [vmem:[%s1 + $0x10] sm:$0xf]
  %v40 = vld [vmem:[%s1 + $0x14] sm:$0xf]
  %v41 = vld [vmem:[%s1 + $0x18] sm:$0xf]
  %v42 = vld [vmem:[%s1 + $0x1c] sm:$0xf]
  %v47 = vunpack.c.l.b16 %v31
  %v48 = vunpack.c.l.b16 %v32
  %v49 = vunpack.c.l.b16 %v33
  %v50 = vunpack.c.l.b16 %v34
  %v51 = vpack.c.b16 %v48, %v47
  %v52 = vpack.c.b16 %v50, %v49
  %v61 = vunpack.c.l.b16 %v35
  %v62 = vunpack.c.l.b16 %v36
  %v63 = vunpack.c.l.b16 %v37
  %v64 = vunpack.c.l.b16 %v38
  %v65 = vunpack.c.l.b16 %v39
  %v66 = vunpack.c.l.b16 %v40
  %v67 = vunpack.c.l.b16 %v41
  %v68 = vunpack.c.l.b16 %v42
  %v69 = vpack.c.b16 %v62, %v61
  %v70 = vpack.c.b16 %v64, %v63
  %v71 = vpack.c.b16 %v66, %v65
  %v72 = vpack.c.b16 %v68, %v67
  %vm77 = vcmask 523264
  %v79 = vsel %vm77, %v51, 0
  %v82 = vsel %vm77, %v52, 0
  %84 = vmatprep.subr.bf16.mxu0 0
  %85 = vmatpush1.bf16.msra.mxu0 0
  %86 = vmatprep.subr.bf16.mxu0 0
  %87 = vmatpush1.bf16.msra.mxu0 0
  %88 = vmatprep.subr.bf16.mxu0 0
  %89 = vmatpush1.bf16.msra.mxu0 0
  %90 = vmatprep.subr.bf16.mxu0 0
  %91 = vmatpush1.bf16.msra.mxu0 0
  %92 = vmatprep.subr.bf16.mxu0 0
  %93 = vmatpush1.bf16.msra.mxu0 %v72
  %94 = vmatprep.subr.bf16.mxu0 0
  %95 = vmatpush1.bf16.msra.mxu0 %v71
  %96 = vmatprep.subr.bf16.mxu0 0
  %97 = vmatpush1.bf16.msra.mxu0 %v70
  %98 = vmatprep.subr.bf16.mxu0 0
  %99 = vmatpush1.bf16.msra.mxu0 %v69
  %100 = vmatprep.subr.bf16.mxu0 0
  %101 = vmatpush2.bf16.msra.mxu0 0
  %102 = vmatprep.subr.bf16.mxu0 0
  %103 = vmatpush2.bf16.msra.mxu0 0
  %104 = vmatprep.subr.bf16.mxu0 0
  %105 = vmatpush2.bf16.msra.mxu0 0
  %106 = vmatprep.subr.bf16.mxu0 0
  %107 = vmatpush2.bf16.msra.mxu0 0
  %108 = vmatprep.subr.bf16.mxu0 0
  %109 = vmatpush2.bf16.msra.mxu0 0
  %110 = vmatprep.subr.bf16.mxu0 0
  %111 = vmatpush2.bf16.msra.mxu0 0
  %112 = vmatprep.subr.bf16.mxu0 0
  %113 = vmatpush2.bf16.msra.mxu0 0
  %114 = vmatprep.subr.bf16.mxu0 0
  %115 = vmatpush2.bf16.msra.mxu0 0
  %116 = vmatprep.mubr.bf16.mxu0 0
  %117 = vmatmul.mubr.bf16.gmra.mxu0 %v79
  %v118 = vpop.f32.mrf.mxu0
  %v119 = vadd.f32 0.0, %v118
  %v120 = vpop.f32.mrf.mxu0
  %v121 = vpop.f32.mrf.mxu0
  %v122 = vadd.f32 0.0, %v121
  %v123 = vpop.f32.mrf.mxu0
  %124 = vmatprep.mubr.bf16.mxu0 0
  %125 = vmatmul.mubr.bf16.gmra.mxu0 %v82
  %v126 = vpop.f32.mrf.mxu0
  %v127 = vadd.f32 0.0, %v126
  %v128 = vpop.f32.mrf.mxu0
  %v129 = vpop.f32.mrf.mxu0
  %v130 = vadd.f32 0.0, %v129
  %v131 = vpop.f32.mrf.mxu0
  %132 = vdwg.mxu0
  %v133 = vadd.f32 %v27, %v119
  %v134 = vadd.f32 %v28, %v122
  %v135 = vadd.f32 %v29, %v127
  %v136 = vadd.f32 %v30, %v130
  %vm137 = vcmask 408576
  %138 = vst.msk [vmem:[#allocation2] sm:$0xff] %vm137, %v133
  %139 = vst.msk [vmem:[#allocation2 + $0x8] sm:$0xff] %vm137, %v134
  %140 = vst.msk [vmem:[#allocation2 + $0x10] sm:$0xff] %vm137, %v135
  %141 = vst.msk [vmem:[#allocation2 + $0x18] sm:$0xff] %vm137, %v136
  // Predicated region
  $region22: #{_lambda_.13} parent=0 // pred_check
    %p142 = pneg %p18
  $region23: #{_lambda_.13} parent=0 // pred_check_branch
    %144 = sbr.rel (%p142) target = $region25
  $region24: #{_lambda_.13} parent=0 // pred_region
    %v145 = vld [vmem:[#allocation2] sm:$0xff]
    %v146 = vld [vmem:[#allocation2 + $0x8] sm:$0xff]
    %v147 = vld [vmem:[#allocation2 + $0x10] sm:$0xff]
    %v148 = vld [vmem:[#allocation2 + $0x18] sm:$0xff]
    %v149 = vld [vmem:[%s2] sm:$0xff]
    %v150 = vld [vmem:[%s2 + $0x8] sm:$0xff]
    %v151 = vld [vmem:[%s2 + $0x10] sm:$0xff]
    %v152 = vld [vmem:[%s2 + $0x18] sm:$0xff]
    %154 = vset.pattern.permute.xlu0 0
    %155 = vperm.xlu0 %154, %v149
    %v156 = vpop.permute.xlu0 %155
    %159 = vset.pattern.permute.xlu0 0
    %160 = vperm.xlu0 %159, %v150
    %v161 = vpop.permute.xlu0 %160
    %164 = vset.pattern.permute.xlu0 0
    %165 = vperm.xlu0 %164, %v151
    %v166 = vpop.permute.xlu0 %165
    %169 = vset.pattern.permute.xlu0 0
    %170 = vperm.xlu0 %169, %v152
    %v171 = vpop.permute.xlu0 %170
    %v173 = vmul.f32 %v145, %v156
    %v174 = vmul.f32 %v146, %v161
    %v175 = vmul.f32 %v147, %v166
    %v176 = vmul.f32 %v148, %v171
    %v177 = vld [vmem:[%s3] sm:$0xff]
    %v178 = vld [vmem:[%s3 + $0x8] sm:$0xff]
    %v179 = vld [vmem:[%s3 + $0x10] sm:$0xff]
    %v180 = vld [vmem:[%s3 + $0x18] sm:$0xff]
    %182 = vset.pattern.permute.xlu0 0
    %183 = vperm.xlu0 %182, %v177
    %v184 = vpop.permute.xlu0 %183
    %187 = vset.pattern.permute.xlu0 0
    %188 = vperm.xlu0 %187, %v178
    %v189 = vpop.permute.xlu0 %188
    %192 = vset.pattern.permute.xlu0 0
    %193 = vperm.xlu0 %192, %v179
    %v194 = vpop.permute.xlu0 %193
    %197 = vset.pattern.permute.xlu0 0
    %198 = vperm.xlu0 %197, %v180
    %v199 = vpop.permute.xlu0 %198
    %v201 = vadd.f32 %v173, %v184
    %v202 = vadd.f32 %v174, %v189
    %v203 = vadd.f32 %v175, %v194
    %v204 = vadd.f32 %v176, %v199
    %v205 = vmax.f32 %v201, 0.0
    %v206 = vmax.f32 %v202, 0.0
    %v207 = vmax.f32 %v203, 0.0
    %v208 = vmax.f32 %v204, 0.0
    %209 = vst.msk [vmem:[%s4] sm:$0xff] %vm137, %v205
    %210 = vst.msk [vmem:[%s4 + $0x8] sm:$0xff] %vm137, %v206
    %211 = vst.msk [vmem:[%s4 + $0x10] sm:$0xff] %vm137, %v207
    %212 = vst.msk [vmem:[%s4 + $0x18] sm:$0xff] %vm137, %v208
  $region25: #{_lambda_.13} parent=0 // pred_fallthru
    _
  // Predicated region
  $region26: #{_lambda_.13} parent=0 // pred_check
    _
  $region27: #{_lambda_.13} parent=0 // pred_check_branch
    %214 = sbr.rel (0) target = $region29
  $region28: #{_lambda_.13} parent=0 // pred_region
    _
  $region29: #{_lambda_.13} parent=0 // pred_fallthru
    _
  // Predicated region
  $region30: #{_lambda_.13} parent=0 // pred_check
    _
  $region31: #{_lambda_.13} parent=0 // pred_check_branch
    %216 = sbr.rel (0) target = $region33
  $region32: #{_lambda_.13} parent=0 // pred_region
    _
  $region33: #{_lambda_.13} parent=0 // pred_fallthru
    _

// kernel: _lambda_.12
$region0: #{_lambda_.12}
  #allocation0 [shape = 'u32[]', space=smem, size = 0x4, offset = 0x4, fixed_abs, tag = 'smem constant byte address 0x4 - core index']
  #allocation1 [shape = 'u32[144,128]{1,0:T(1,128)}', space=vmem, size = 0x12000, scoped, tag = 'internal scratch']
  #allocation2 [shape = 'f32[16,32]{1,0:T(8,128)}', space=vmem, size = 0x2000, scoped, tag = 'scratch operand']
  %s0 = inlined_call_operand.vmem [shape: bf16[16,176], index: 0, kind: input, shape index: {}]
  %s1 = inlined_call_operand.vmem [shape: bf16[176,32], index: 1, kind: input, shape index: {}]
  %s2 = inlined_call_operand.vmem [shape: f32[16,1], index: 2, kind: input, shape index: {}]
  %s3 = inlined_call_operand.vmem [shape: f32[16,1], index: 3, kind: input, shape index: {}]
  %s4 = inlined_call_operand.vmem [shape: f32[16,32], index: 4, kind: output, shape index: {}]
  %s5 = sld [smem:[#allocation0]]
  $region34: #{_lambda_.12} parent=0
    _
  %s7 = ssub.s32 1, %s5
  %s8 = scalar_select 0, %s7, %s5
  // Predicated region
  $region2: #{_lambda_.12} parent=0 // pred_check
    _
  $region3: #{_lambda_.12} parent=0 // pred_check_branch
    %10 = sbr.rel (0) target = $region5
  $region4: #{_lambda_.12} parent=0 // pred_region
    _
  $region5: #{_lambda_.12} parent=0 // pred_fallthru
    _
  // Predicated region
  $region6: #{_lambda_.12} parent=0 // pred_check
    _
  $region7: #{_lambda_.12} parent=0 // pred_check_branch
    %12 = sbr.rel (0) target = $region9
  $region8: #{_lambda_.12} parent=0 // pred_region
    _
  $region9: #{_lambda_.12} parent=0 // pred_fallthru
    _
  // Predicated region
  $region10: #{_lambda_.12} parent=0 // pred_check
    _
  $region11: #{_lambda_.12} parent=0 // pred_check_branch
    %14 = sbr.rel (0) target = $region13
  $region12: #{_lambda_.12} parent=0 // pred_region
    _
  $region13: #{_lambda_.12} parent=0 // pred_fallthru
    _
  // Predicated region
  $region14: #{_lambda_.12} parent=0 // pred_check
    _
  $region15: #{_lambda_.12} parent=0 // pred_check_branch
    %16 = sbr.rel (0) target = $region17
  $region16: #{_lambda_.12} parent=0 // pred_region
    _
  $region17: #{_lambda_.12} parent=0 // pred_fallthru
    _
  %p18 = scmp.eq.s32.totalorder 0, 0
  // Predicated region
  $region18: #{_lambda_.12} parent=0 // pred_check
    %p19 = pneg %p18
  $region19: #{_lambda_.12} parent=0 // pred_check_branch
    %21 = sbr.rel (%p19) target = $region21
  $region20: #{_lambda_.12} parent=0 // pred_region
    %vm22 = vcmask 261120
    %23 = vst.msk [vmem:[#allocation2] sm:$0xff] %vm22, 0.0
    %24 = vst.msk [vmem:[#allocation2 + $0x8] sm:$0xff] %vm22, 0.0
  $region21: #{_lambda_.12} parent=0 // pred_fallthru
    _
  %v25 = vld [vmem:[#allocation2] sm:$0xff]
  %v26 = vld [vmem:[#allocation2 + $0x8] sm:$0xff]
  %v27 = vld [vmem:[%s0] sm:$0xff]
  %v28 = vld [vmem:[%s0 + $0x8] sm:$0xff]
  %v29 = vld [vmem:[%s1] sm:$0xf]
  %v30 = vld [vmem:[%s1 + $0x4] sm:$0xf]
  %v31 = vld [vmem:[%s1 + $0x8] sm:$0xf]
  %v32 = vld [vmem:[%s1 + $0xc] sm:$0xf]
  %v33 = vld [vmem:[%s1 + $0x10] sm:$0xf]
  %v34 = vld [vmem:[%s1 + $0x14] sm:$0xf]
  %v35 = vld [vmem:[%s1 + $0x18] sm:$0xf]
  %v36 = vld [vmem:[%s1 + $0x1c] sm:$0xf]
  %v37 = vld [vmem:[%s1 + $0x20] sm:$0xf]
  %v38 = vld [vmem:[%s1 + $0x24] sm:$0xf]
  %v39 = vld [vmem:[%s1 + $0x28] sm:$0xf]
  %v40 = vld [vmem:[%s1 + $0x2c] sm:$0xf]
  %v41 = vld [vmem:[%s1 + $0x30] sm:$0xf]
  %v42 = vld [vmem:[%s1 + $0x34] sm:$0xf]
  %v43 = vld [vmem:[%s1 + $0x38] sm:$0xf]
  %v44 = vld [vmem:[%s1 + $0x3c] sm:$0xf]
  %v45 = vld [vmem:[%s1 + $0x40] sm:$0xf]
  %v46 = vld [vmem:[%s1 + $0x44] sm:$0xf]
  %v47 = vld [vmem:[%s1 + $0x48] sm:$0xf]
  %v48 = vld [vmem:[%s1 + $0x4c] sm:$0xf]
  %v49 = vld [vmem:[%s1 + $0x50] sm:$0xf]
  %v50 = vld [vmem:[%s1 + $0x54] sm:$0xf]
  %v53 = vunpack.c.l.b16 %v27
  %v54 = vunpack.c.h.b16 %v27
  %v55 = vunpack.c.l.b16 %v28
  %v56 = vunpack.c.h.b16 %v28
  %v57 = vpack.c.b16 %v55, %v53
  %v58 = vpack.c.b16 %v56, %v54
  %v82 = vunpack.c.l.b16 %v29
  %v83 = vunpack.c.l.b16 %v30
  %v84 = vunpack.c.l.b16 %v31
  %v85 = vunpack.c.l.b16 %v32
  %v86 = vunpack.c.l.b16 %v33
  %v87 = vunpack.c.l.b16 %v34
  %v88 = vunpack.c.l.b16 %v35
  %v89 = vunpack.c.l.b16 %v36
  %v90 = vunpack.c.l.b16 %v37
  %v91 = vunpack.c.l.b16 %v38
  %v92 = vunpack.c.l.b16 %v39
  %v93 = vunpack.c.l.b16 %v40
  %v94 = vunpack.c.l.b16 %v41
  %v95 = vunpack.c.l.b16 %v42
  %v96 = vunpack.c.l.b16 %v43
  %v97 = vunpack.c.l.b16 %v44
  %v98 = vunpack.c.l.b16 %v45
  %v99 = vunpack.c.l.b16 %v46
  %v100 = vunpack.c.l.b16 %v47
  %v101 = vunpack.c.l.b16 %v48
  %v102 = vunpack.c.l.b16 %v49
  %v103 = vunpack.c.l.b16 %v50
  %v104 = vpack.c.b16 %v83, %v82
  %v105 = vpack.c.b16 %v85, %v84
  %v106 = vpack.c.b16 %v87, %v86
  %v107 = vpack.c.b16 %v89, %v88
  %v108 = vpack.c.b16 %v91, %v90
  %v109 = vpack.c.b16 %v93, %v92
  %v110 = vpack.c.b16 %v95, %v94
  %v111 = vpack.c.b16 %v97, %v96
  %v112 = vpack.c.b16 %v99, %v98
  %v113 = vpack.c.b16 %v101, %v100
  %v114 = vpack.c.b16 %v103, %v102
  %vm126 = vcmask 392192
  %v128 = vsel %vm126, %v58, 0
  %130 = vmatprep.subr.bf16.mxu0 0
  %131 = vmatpush1.bf16.msra.mxu0 %v111
  %132 = vmatprep.subr.bf16.mxu0 0
  %133 = vmatpush1.bf16.msra.mxu0 %v110
  %134 = vmatprep.subr.bf16.mxu0 0
  %135 = vmatpush1.bf16.msra.mxu0 %v109
  %136 = vmatprep.subr.bf16.mxu0 0
  %137 = vmatpush1.bf16.msra.mxu0 %v108
  %138 = vmatprep.subr.bf16.mxu0 0
  %139 = vmatpush1.bf16.msra.mxu0 %v107
  %140 = vmatprep.subr.bf16.mxu0 0
  %141 = vmatpush1.bf16.msra.mxu0 %v106
  %142 = vmatprep.subr.bf16.mxu0 0
  %143 = vmatpush1.bf16.msra.mxu0 %v105
  %144 = vmatprep.subr.bf16.mxu0 0
  %145 = vmatpush1.bf16.msra.mxu0 %v104
  %146 = vmatprep.subr.bf16.mxu0 0
  %147 = vmatpush2.bf16.msra.mxu0 0
  %148 = vmatprep.subr.bf16.mxu0 0
  %149 = vmatpush2.bf16.msra.mxu0 0
  %150 = vmatprep.subr.bf16.mxu0 0
  %151 = vmatpush2.bf16.msra.mxu0 0
  %152 = vmatprep.subr.bf16.mxu0 0
  %153 = vmatpush2.bf16.msra.mxu0 0
  %154 = vmatprep.subr.bf16.mxu0 0
  %155 = vmatpush2.bf16.msra.mxu0 0
  %156 = vmatprep.subr.bf16.mxu0 0
  %157 = vmatpush2.bf16.msra.mxu0 %v114
  %158 = vmatprep.subr.bf16.mxu0 0
  %159 = vmatpush2.bf16.msra.mxu0 %v113
  %160 = vmatprep.subr.bf16.mxu0 0
  %161 = vmatpush2.bf16.msra.mxu0 %v112
  %162 = vmatprep.mubr.bf16.mxu0 %v128
  %163 = vmatmul.mubr.bf16.gmra.mxu0 %v57
  %v164 = vpop.f32.mrf.mxu0
  %v165 = vadd.f32 0.0, %v164
  %v166 = vpop.f32.mrf.mxu0
  %v167 = vpop.f32.mrf.mxu0
  %v168 = vadd.f32 0.0, %v167
  %v169 = vpop.f32.mrf.mxu0
  %170 = vdwg.mxu0
  %v171 = vadd.f32 %v25, %v165
  %v172 = vadd.f32 %v26, %v168
  %vm173 = vcmask 261120
  %174 = vst.msk [vmem:[#allocation2] sm:$0xff] %vm173, %v171
  %175 = vst.msk [vmem:[#allocation2 + $0x8] sm:$0xff] %vm173, %v172
  // Predicated region
  $region22: #{_lambda_.12} parent=0 // pred_check
    %p176 = pneg %p18
  $region23: #{_lambda_.12} parent=0 // pred_check_branch
    %178 = sbr.rel (%p176) target = $region25
  $region24: #{_lambda_.12} parent=0 // pred_region
    %v179 = vld [vmem:[#allocation2] sm:$0xff]
    %v180 = vld [vmem:[#allocation2 + $0x8] sm:$0xff]
    %v181 = vld [vmem:[%s2] sm:$0xff]
    %v182 = vld [vmem:[%s2 + $0x8] sm:$0xff]
    %184 = vset.pattern.permute.xlu0 0
    %185 = vperm.xlu0 %184, %v181
    %v186 = vpop.permute.xlu0 %185
    %189 = vset.pattern.permute.xlu0 0
    %190 = vperm.xlu0 %189, %v182
    %v191 = vpop.permute.xlu0 %190
    %v193 = vmul.f32 %v179, %v186
    %v194 = vmul.f32 %v180, %v191
    %v195 = vld [vmem:[%s3] sm:$0xff]
    %v196 = vld [vmem:[%s3 + $0x8] sm:$0xff]
    %198 = vset.pattern.permute.xlu0 0
    %199 = vperm.xlu0 %198, %v195
    %v200 = vpop.permute.xlu0 %199
    %203 = vset.pattern.permute.xlu0 0
    %204 = vperm.xlu0 %203, %v196
    %v205 = vpop.permute.xlu0 %204
    %v207 = vadd.f32 %v193, %v200
    %v208 = vadd.f32 %v194, %v205
    %v209 = vmax.f32 %v207, 0.0
    %v210 = vmax.f32 %v208, 0.0
    %211 = vst.msk [vmem:[%s4] sm:$0xff] %vm173, %v209
    %212 = vst.msk [vmem:[%s4 + $0x8] sm:$0xff] %vm173, %v210
  $region25: #{_lambda_.12} parent=0 // pred_fallthru
    _
  // Predicated region
  $region26: #{_lambda_.12} parent=0 // pred_check
    _
  $region27: #{_lambda_.12} parent=0 // pred_check_branch
    %214 = sbr.rel (0) target = $region29
  $region28: #{_lambda_.12} parent=0 // pred_region
    _
  $region29: #{_lambda_.12} parent=0 // pred_fallthru
    _
  // Predicated region
  $region30: #{_lambda_.12} parent=0 // pred_check
    _
  $region31: #{_lambda_.12} parent=0 // pred_check_branch
    %216 = sbr.rel (0) target = $region33
  $region32: #{_lambda_.12} parent=0 // pred_region
    _
  $region33: #{_lambda_.12} parent=0 // pred_fallthru
    _

// kernel: _lambda_.14
$region0: #{_lambda_.14}
  #allocation0 [shape = 'u32[]', space=smem, size = 0x4, offset = 0x4, fixed_abs, tag = 'smem constant byte address 0x4 - core index']
  #allocation1 [shape = 'u32[144,128]{1,0:T(1,128)}', space=vmem, size = 0x12000, scoped, tag = 'internal scratch']
  #allocation2 [shape = 'f32[16,162]{1,0:T(8,128)}', space=vmem, size = 0x4000, scoped, tag = 'scratch operand']
  %s0 = inlined_call_operand.vmem [shape: bf16[16,32], index: 0, kind: input, shape index: {}]
  %s1 = inlined_call_operand.vmem [shape: bf16[32,162], index: 1, kind: input, shape index: {}]
  %s2 = inlined_call_operand.vmem [shape: f32[16,1], index: 2, kind: input, shape index: {}]
  %s3 = inlined_call_operand.vmem [shape: f32[16,1], index: 3, kind: input, shape index: {}]
  %s4 = inlined_call_operand.vmem [shape: f32[16,162], index: 4, kind: output, shape index: {}]
  %s5 = sld [smem:[#allocation0]]
  $region34: #{_lambda_.14} parent=0
    _
  %s7 = ssub.s32 1, %s5
  %s8 = scalar_select 0, %s7, %s5
  // Predicated region
  $region2: #{_lambda_.14} parent=0 // pred_check
    _
  $region3: #{_lambda_.14} parent=0 // pred_check_branch
    %10 = sbr.rel (0) target = $region5
  $region4: #{_lambda_.14} parent=0 // pred_region
    _
  $region5: #{_lambda_.14} parent=0 // pred_fallthru
    _
  // Predicated region
  $region6: #{_lambda_.14} parent=0 // pred_check
    _
  $region7: #{_lambda_.14} parent=0 // pred_check_branch
    %12 = sbr.rel (0) target = $region9
  $region8: #{_lambda_.14} parent=0 // pred_region
    _
  $region9: #{_lambda_.14} parent=0 // pred_fallthru
    _
  // Predicated region
  $region10: #{_lambda_.14} parent=0 // pred_check
    _
  $region11: #{_lambda_.14} parent=0 // pred_check_branch
    %14 = sbr.rel (0) target = $region13
  $region12: #{_lambda_.14} parent=0 // pred_region
    _
  $region13: #{_lambda_.14} parent=0 // pred_fallthru
    _
  // Predicated region
  $region14: #{_lambda_.14} parent=0 // pred_check
    _
  $region15: #{_lambda_.14} parent=0 // pred_check_branch
    %16 = sbr.rel (0) target = $region17
  $region16: #{_lambda_.14} parent=0 // pred_region
    _
  $region17: #{_lambda_.14} parent=0 // pred_fallthru
    _
  %p18 = scmp.eq.s32.totalorder 0, 0
  // Predicated region
  $region18: #{_lambda_.14} parent=0 // pred_check
    %p19 = pneg %p18
  $region19: #{_lambda_.14} parent=0 // pred_check_branch
    %21 = sbr.rel (%p19) target = $region21
  $region20: #{_lambda_.14} parent=0 // pred_region
    %22 = vst [vmem:[#allocation2] sm:$0xff] 0.0
    %vm23 = vcmask 277504
    %24 = vst.msk [vmem:[#allocation2 + $0x8] sm:$0xff] %vm23, 0.0
    %25 = vst [vmem:[#allocation2 + $0x10] sm:$0xff] 0.0
    %26 = vst.msk [vmem:[#allocation2 + $0x18] sm:$0xff] %vm23, 0.0
  $region21: #{_lambda_.14} parent=0 // pred_fallthru
    _
  %v27 = vld [vmem:[#allocation2] sm:$0xff]
  %v28 = vld [vmem:[#allocation2 + $0x8] sm:$0xff]
  %v29 = vld [vmem:[#allocation2 + $0x10] sm:$0xff]
  %v30 = vld [vmem:[#allocation2 + $0x18] sm:$0xff]
  %v31 = vld [vmem:[%s0] sm:$0xf]
  %v32 = vld [vmem:[%s0 + $0x4] sm:$0xf]
  %v33 = vld [vmem:[%s1] sm:$0xff]
  %v34 = vld [vmem:[%s1 + $0x8] sm:$0xff]
  %v35 = vld [vmem:[%s1 + $0x10] sm:$0xff]
  %v36 = vld [vmem:[%s1 + $0x18] sm:$0xff]
  %v39 = vunpack.c.l.b16 %v31
  %v40 = vunpack.c.l.b16 %v32
  %v41 = vpack.c.b16 %v40, %v39
  %v46 = vunpack.c.l.b16 %v33
  %v47 = vunpack.c.h.b16 %v33
  %v48 = vunpack.c.l.b16 %v34
  %v49 = vunpack.c.h.b16 %v34
  %v50 = vunpack.c.l.b16 %v35
  %v51 = vunpack.c.h.b16 %v35
  %v52 = vunpack.c.l.b16 %v36
  %v53 = vunpack.c.h.b16 %v36
  %v54 = vpack.c.b16 %v48, %v46
  %v55 = vpack.c.b16 %v49, %v47
  %v56 = vpack.c.b16 %v52, %v50
  %v57 = vpack.c.b16 %v53, %v51
  %vm62 = vcmask 261120
  %v64 = vsel %vm62, %v41, 0
  %66 = vmatprep.subr.bf16.mxu0 0
  %67 = vmatpush1.bf16.msra.mxu0 0
  %68 = vmatprep.subr.bf16.mxu0 0
  %69 = vmatpush1.bf16.msra.mxu0 0
  %70 = vmatprep.subr.bf16.mxu0 0
  %71 = vmatpush1.bf16.msra.mxu0 0
  %72 = vmatprep.subr.bf16.mxu0 0
  %73 = vmatpush1.bf16.msra.mxu0 0
  %74 = vmatprep.subr.bf16.mxu0 0
  %75 = vmatpush1.bf16.msra.mxu0 0
  %76 = vmatprep.subr.bf16.mxu0 0
  %77 = vmatpush1.bf16.msra.mxu0 0
  %78 = vmatprep.subr.bf16.mxu0 %v57
  %79 = vmatpush1.bf16.msra.mxu0 %v56
  %80 = vmatprep.subr.bf16.mxu0 %v55
  %81 = vmatpush1.bf16.msra.mxu0 %v54
  %82 = vmatprep.subr.bf16.mxu0 0
  %83 = vmatpush2.bf16.msra.mxu0 0
  %84 = vmatprep.subr.bf16.mxu0 0
  %85 = vmatpush2.bf16.msra.mxu0 0
  %86 = vmatprep.subr.bf16.mxu0 0
  %87 = vmatpush2.bf16.msra.mxu0 0
  %88 = vmatprep.subr.bf16.mxu0 0
  %89 = vmatpush2.bf16.msra.mxu0 0
  %90 = vmatprep.subr.bf16.mxu0 0
  %91 = vmatpush2.bf16.msra.mxu0 0
  %92 = vmatprep.subr.bf16.mxu0 0
  %93 = vmatpush2.bf16.msra.mxu0 0
  %94 = vmatprep.subr.bf16.mxu0 0
  %95 = vmatpush2.bf16.msra.mxu0 0
  %96 = vmatprep.subr.bf16.mxu0 0
  %97 = vmatpush2.bf16.msra.mxu0 0
  %98 = vmatprep.mubr.bf16.mxu0 0
  %99 = vmatmul.mubr.bf16.gmra.mxu0 %v64
  %v100 = vpop.f32.mrf.mxu0
  %v101 = vadd.f32 0.0, %v100
  %v102 = vpop.f32.mrf.mxu0
  %v103 = vadd.f32 0.0, %v102
  %v104 = vpop.f32.mrf.mxu0
  %v105 = vadd.f32 0.0, %v104
  %v106 = vpop.f32.mrf.mxu0
  %v107 = vadd.f32 0.0, %v106
  %108 = vdwg.mxu0
  %v109 = vadd.f32 %v27, %v101
  %v110 = vadd.f32 %v28, %v103
  %v111 = vadd.f32 %v29, %v105
  %v112 = vadd.f32 %v30, %v107
  %113 = vst [vmem:[#allocation2] sm:$0xff] %v109
  %vm114 = vcmask 277504
  %115 = vst.msk [vmem:[#allocation2 + $0x8] sm:$0xff] %vm114, %v110
  %116 = vst [vmem:[#allocation2 + $0x10] sm:$0xff] %v111
  %117 = vst.msk [vmem:[#allocation2 + $0x18] sm:$0xff] %vm114, %v112
  // Predicated region
  $region22: #{_lambda_.14} parent=0 // pred_check
    %p118 = pneg %p18
  $region23: #{_lambda_.14} parent=0 // pred_check_branch
    %120 = sbr.rel (%p118) target = $region25
  $region24: #{_lambda_.14} parent=0 // pred_region
    %v121 = vld [vmem:[#allocation2] sm:$0xff]
    %v122 = vld [vmem:[#allocation2 + $0x8] sm:$0xff]
    %v123 = vld [vmem:[#allocation2 + $0x10] sm:$0xff]
    %v124 = vld [vmem:[#allocation2 + $0x18] sm:$0xff]
    %v125 = vtanh.pop %v121
    %v126 = vtanh.pop %v122
    %v127 = vtanh.pop %v123
    %v128 = vtanh.pop %v124
    %129 = vst [vmem:[%s4] sm:$0xff] %v125
    %130 = vst.msk [vmem:[%s4 + $0x8] sm:$0xff] %vm114, %v126
    %131 = vst [vmem:[%s4 + $0x10] sm:$0xff] %v127
    %132 = vst.msk [vmem:[%s4 + $0x18] sm:$0xff] %vm114, %v128
  $region25: #{_lambda_.14} parent=0 // pred_fallthru
    _
  // Predicated region
  $region26: #{_lambda_.14} parent=0 // pred_check
    _
  $region27: #{_lambda_.14} parent=0 // pred_check_branch
    %134 = sbr.rel (0) target = $region29
  $region28: #{_lambda_.14} parent=0 // pred_region
    _
  $region29: #{_lambda_.14} parent=0 // pred_fallthru
    _
  // Predicated region
  $region30: #{_lambda_.14} parent=0 // pred_check
    _
  $region31: #{_lambda_.14} parent=0 // pred_check_branch
    %136 = sbr.rel (0) target = $region33
  $region32: #{_lambda_.14} parent=0 // pred_region
    _
  $region33: #{_lambda_.14} parent=0 // pred_fallthru
    _

// kernel: _lambda_.15
$region0: #{_lambda_.15}
  #allocation0 [shape = 'u32[]', space=smem, size = 0x4, offset = 0x4, fixed_abs, tag = 'smem constant byte address 0x4 - core index']
  #allocation1 [shape = 'u32[144,128]{1,0:T(1,128)}', space=vmem, size = 0x12000, scoped, tag = 'internal scratch']
  #allocation2 [shape = 'f32[8,128]{1,0:T(8,128)}', space=vmem, size = 0x1000, scoped, tag = 'scratch operand']
  %s0 = inlined_call_operand.vmem [shape: bf16[8,64], index: 0, kind: input, shape index: {}]
  %s1 = inlined_call_operand.vmem [shape: bf16[64,128], index: 1, kind: input, shape index: {}]
  %s2 = inlined_call_operand.vmem [shape: f32[8,1], index: 2, kind: input, shape index: {}]
  %s3 = inlined_call_operand.vmem [shape: f32[8,1], index: 3, kind: input, shape index: {}]
  %s4 = inlined_call_operand.vmem [shape: f32[8,128], index: 4, kind: output, shape index: {}]
  %s5 = sld [smem:[#allocation0]]
  $region34: #{_lambda_.15} parent=0
    _
  %s7 = ssub.s32 1, %s5
  %s8 = scalar_select 0, %s7, %s5
  // Predicated region
  $region2: #{_lambda_.15} parent=0 // pred_check
    _
  $region3: #{_lambda_.15} parent=0 // pred_check_branch
    %10 = sbr.rel (0) target = $region5
  $region4: #{_lambda_.15} parent=0 // pred_region
    _
  $region5: #{_lambda_.15} parent=0 // pred_fallthru
    _
  // Predicated region
  $region6: #{_lambda_.15} parent=0 // pred_check
    _
  $region7: #{_lambda_.15} parent=0 // pred_check_branch
    %12 = sbr.rel (0) target = $region9
  $region8: #{_lambda_.15} parent=0 // pred_region
    _
  $region9: #{_lambda_.15} parent=0 // pred_fallthru
    _
  // Predicated region
  $region10: #{_lambda_.15} parent=0 // pred_check
    _
  $region11: #{_lambda_.15} parent=0 // pred_check_branch
    %14 = sbr.rel (0) target = $region13
  $region12: #{_lambda_.15} parent=0 // pred_region
    _
  $region13: #{_lambda_.15} parent=0 // pred_fallthru
    _
  // Predicated region
  $region14: #{_lambda_.15} parent=0 // pred_check
    _
  $region15: #{_lambda_.15} parent=0 // pred_check_branch
    %16 = sbr.rel (0) target = $region17
  $region16: #{_lambda_.15} parent=0 // pred_region
    _
  $region17: #{_lambda_.15} parent=0 // pred_fallthru
    _
  %p18 = scmp.eq.s32.totalorder 0, 0
  // Predicated region
  $region18: #{_lambda_.15} parent=0 // pred_check
    %p19 = pneg %p18
  $region19: #{_lambda_.15} parent=0 // pred_check_branch
    %21 = sbr.rel (%p19) target = $region21
  $region20: #{_lambda_.15} parent=0 // pred_region
    %22 = vst [vmem:[#allocation2] sm:$0xff] 0.0
  $region21: #{_lambda_.15} parent=0 // pred_fallthru
    _
  %v23 = vld [vmem:[#allocation2] sm:$0xff]
  %v24 = vld [vmem:[%s0] sm:$0xf]
  %v25 = vld [vmem:[%s1] sm:$0xf]
  %v26 = vld [vmem:[%s1 + $0x4] sm:$0xf]
  %v27 = vld [vmem:[%s1 + $0x8] sm:$0xf]
  %v28 = vld [vmem:[%s1 + $0xc] sm:$0xf]
  %v29 = vld [vmem:[%s1 + $0x10] sm:$0xf]
  %v30 = vld [vmem:[%s1 + $0x14] sm:$0xf]
  %v31 = vld [vmem:[%s1 + $0x18] sm:$0xf]
  %v32 = vld [vmem:[%s1 + $0x1c] sm:$0xf]
  %v41 = vunpack.c.l.b16 %v25
  %v42 = vunpack.c.l.b16 %v26
  %v43 = vunpack.c.l.b16 %v27
  %v44 = vunpack.c.l.b16 %v28
  %v45 = vunpack.c.l.b16 %v29
  %v46 = vunpack.c.l.b16 %v30
  %v47 = vunpack.c.l.b16 %v31
  %v48 = vunpack.c.l.b16 %v32
  %v49 = vpack.c.b16 %v42, %v41
  %v50 = vpack.c.b16 %v44, %v43
  %v51 = vpack.c.b16 %v46, %v45
  %v52 = vpack.c.b16 %v48, %v47
  %vm57 = vcmask 523264
  %v59 = vsel %vm57, %v24, 0
  %61 = vmatprep.subr.bf16.mxu0 0
  %62 = vmatpush1.bf16.msra.mxu0 0
  %63 = vmatprep.subr.bf16.mxu0 0
  %64 = vmatpush1.bf16.msra.mxu0 0
  %65 = vmatprep.subr.bf16.mxu0 0
  %66 = vmatpush1.bf16.msra.mxu0 0
  %67 = vmatprep.subr.bf16.mxu0 0
  %68 = vmatpush1.bf16.msra.mxu0 0
  %69 = vmatprep.subr.bf16.mxu0 0
  %70 = vmatpush1.bf16.msra.mxu0 %v52
  %71 = vmatprep.subr.bf16.mxu0 0
  %72 = vmatpush1.bf16.msra.mxu0 %v51
  %73 = vmatprep.subr.bf16.mxu0 0
  %74 = vmatpush1.bf16.msra.mxu0 %v50
  %75 = vmatprep.subr.bf16.mxu0 0
  %76 = vmatpush1.bf16.msra.mxu0 %v49
  %77 = vmatprep.subr.bf16.mxu0 0
  %78 = vmatpush2.bf16.msra.mxu0 0
  %79 = vmatprep.subr.bf16.mxu0 0
  %80 = vmatpush2.bf16.msra.mxu0 0
  %81 = vmatprep.subr.bf16.mxu0 0
  %82 = vmatpush2.bf16.msra.mxu0 0
  %83 = vmatprep.subr.bf16.mxu0 0
  %84 = vmatpush2.bf16.msra.mxu0 0
  %85 = vmatprep.subr.bf16.mxu0 0
  %86 = vmatpush2.bf16.msra.mxu0 0
  %87 = vmatprep.subr.bf16.mxu0 0
  %88 = vmatpush2.bf16.msra.mxu0 0
  %89 = vmatprep.subr.bf16.mxu0 0
  %90 = vmatpush2.bf16.msra.mxu0 0
  %91 = vmatprep.subr.bf16.mxu0 0
  %92 = vmatpush2.bf16.msra.mxu0 0
  %93 = vmatprep.mubr.bf16.mxu0 0
  %94 = vmatmul.mubr.bf16.gmra.mxu0 %v59
  %v95 = vpop.f32.mrf.mxu0
  %v96 = vadd.f32 0.0, %v95
  %v97 = vpop.f32.mrf.mxu0
  %v98 = vpop.f32.mrf.mxu0
  %v99 = vpop.f32.mrf.mxu0
  %100 = vdwg.mxu0
  %v101 = vadd.f32 %v23, %v96
  %102 = vst [vmem:[#allocation2] sm:$0xff] %v101
  // Predicated region
  $region22: #{_lambda_.15} parent=0 // pred_check
    %p103 = pneg %p18
  $region23: #{_lambda_.15} parent=0 // pred_check_branch
    %105 = sbr.rel (%p103) target = $region25
  $region24: #{_lambda_.15} parent=0 // pred_region
    %v106 = vld [vmem:[#allocation2] sm:$0xff]
    %vm107 = vcmp.gt.f32.partialorder %v106, 0.0
    %v108 = vmul.f32 %v106, 0.2
    %v109 = vsel %vm107, %v106, %v108
    %110 = vst [vmem:[%s4] sm:$0xff] %v109
  $region25: #{_lambda_.15} parent=0 // pred_fallthru
    _
  // Predicated region
  $region26: #{_lambda_.15} parent=0 // pred_check
    _
  $region27: #{_lambda_.15} parent=0 // pred_check_branch
    %112 = sbr.rel (0) target = $region29
  $region28: #{_lambda_.15} parent=0 // pred_region
    _
  $region29: #{_lambda_.15} parent=0 // pred_fallthru
    _
  // Predicated region
  $region30: #{_lambda_.15} parent=0 // pred_check
    _
  $region31: #{_lambda_.15} parent=0 // pred_check_branch
    %114 = sbr.rel (0) target = $region33
  $region32: #{_lambda_.15} parent=0 // pred_region
    _
  $region33: #{_lambda_.15} parent=0 // pred_fallthru
    _

// kernel: _lambda_.16
$region0: #{_lambda_.16}
  #allocation0 [shape = 'u32[]', space=smem, size = 0x4, offset = 0x4, fixed_abs, tag = 'smem constant byte address 0x4 - core index']
  #allocation1 [shape = 'u32[144,128]{1,0:T(1,128)}', space=vmem, size = 0x12000, scoped, tag = 'internal scratch']
  #allocation2 [shape = 'f32[16,32]{1,0:T(8,128)}', space=vmem, size = 0x2000, scoped, tag = 'scratch operand']
  %s0 = inlined_call_operand.vmem [shape: bf16[16,128], index: 0, kind: input, shape index: {}]
  %s1 = inlined_call_operand.vmem [shape: bf16[128,32], index: 1, kind: input, shape index: {}]
  %s2 = inlined_call_operand.vmem [shape: f32[16,1], index: 2, kind: input, shape index: {}]
  %s3 = inlined_call_operand.vmem [shape: f32[16,1], index: 3, kind: input, shape index: {}]
  %s4 = inlined_call_operand.vmem [shape: f32[16,32], index: 4, kind: output, shape index: {}]
  %s5 = sld [smem:[#allocation0]]
  $region34: #{_lambda_.16} parent=0
    _
  %s7 = ssub.s32 1, %s5
  %s8 = scalar_select 0, %s7, %s5
  // Predicated region
  $region2: #{_lambda_.16} parent=0 // pred_check
    _
  $region3: #{_lambda_.16} parent=0 // pred_check_branch
    %10 = sbr.rel (0) target = $region5
  $region4: #{_lambda_.16} parent=0 // pred_region
    _
  $region5: #{_lambda_.16} parent=0 // pred_fallthru
    _
  // Predicated region
  $region6: #{_lambda_.16} parent=0 // pred_check
    _
  $region7: #{_lambda_.16} parent=0 // pred_check_branch
    %12 = sbr.rel (0) target = $region9
  $region8: #{_lambda_.16} parent=0 // pred_region
    _
  $region9: #{_lambda_.16} parent=0 // pred_fallthru
    _
  // Predicated region
  $region10: #{_lambda_.16} parent=0 // pred_check
    _
  $region11: #{_lambda_.16} parent=0 // pred_check_branch
    %14 = sbr.rel (0) target = $region13
  $region12: #{_lambda_.16} parent=0 // pred_region
    _
  $region13: #{_lambda_.16} parent=0 // pred_fallthru
    _
  // Predicated region
  $region14: #{_lambda_.16} parent=0 // pred_check
    _
  $region15: #{_lambda_.16} parent=0 // pred_check_branch
    %16 = sbr.rel (0) target = $region17
  $region16: #{_lambda_.16} parent=0 // pred_region
    _
  $region17: #{_lambda_.16} parent=0 // pred_fallthru
    _
  %p18 = scmp.eq.s32.totalorder 0, 0
  // Predicated region
  $region18: #{_lambda_.16} parent=0 // pred_check
    %p19 = pneg %p18
  $region19: #{_lambda_.16} parent=0 // pred_check_branch
    %21 = sbr.rel (%p19) target = $region21
  $region20: #{_lambda_.16} parent=0 // pred_region
    %vm22 = vcmask 261120
    %23 = vst.msk [vmem:[#allocation2] sm:$0xff] %vm22, 0.0
    %24 = vst.msk [vmem:[#allocation2 + $0x8] sm:$0xff] %vm22, 0.0
  $region21: #{_lambda_.16} parent=0 // pred_fallthru
    _
  %v25 = vld [vmem:[#allocation2] sm:$0xff]
  %v26 = vld [vmem:[#allocation2 + $0x8] sm:$0xff]
  %v27 = vld [vmem:[%s0] sm:$0xf]
  %v28 = vld [vmem:[%s0 + $0x4] sm:$0xf]
  %v29 = vld [vmem:[%s1] sm:$0xf]
  %v30 = vld [vmem:[%s1 + $0x4] sm:$0xf]
  %v31 = vld [vmem:[%s1 + $0x8] sm:$0xf]
  %v32 = vld [vmem:[%s1 + $0xc] sm:$0xf]
  %v33 = vld [vmem:[%s1 + $0x10] sm:$0xf]
  %v34 = vld [vmem:[%s1 + $0x14] sm:$0xf]
  %v35 = vld [vmem:[%s1 + $0x18] sm:$0xf]
  %v36 = vld [vmem:[%s1 + $0x1c] sm:$0xf]
  %v37 = vld [vmem:[%s1 + $0x20] sm:$0xf]
  %v38 = vld [vmem:[%s1 + $0x24] sm:$0xf]
  %v39 = vld [vmem:[%s1 + $0x28] sm:$0xf]
  %v40 = vld [vmem:[%s1 + $0x2c] sm:$0xf]
  %v41 = vld [vmem:[%s1 + $0x30] sm:$0xf]
  %v42 = vld [vmem:[%s1 + $0x34] sm:$0xf]
  %v43 = vld [vmem:[%s1 + $0x38] sm:$0xf]
  %v44 = vld [vmem:[%s1 + $0x3c] sm:$0xf]
  %v47 = vunpack.c.l.b16 %v27
  %v48 = vunpack.c.l.b16 %v28
  %v49 = vpack.c.b16 %v48, %v47
  %v67 = vunpack.c.l.b16 %v29
  %v68 = vunpack.c.l.b16 %v30
  %v69 = vunpack.c.l.b16 %v31
  %v70 = vunpack.c.l.b16 %v32
  %v71 = vunpack.c.l.b16 %v33
  %v72 = vunpack.c.l.b16 %v34
  %v73 = vunpack.c.l.b16 %v35
  %v74 = vunpack.c.l.b16 %v36
  %v75 = vunpack.c.l.b16 %v37
  %v76 = vunpack.c.l.b16 %v38
  %v77 = vunpack.c.l.b16 %v39
  %v78 = vunpack.c.l.b16 %v40
  %v79 = vunpack.c.l.b16 %v41
  %v80 = vunpack.c.l.b16 %v42
  %v81 = vunpack.c.l.b16 %v43
  %v82 = vunpack.c.l.b16 %v44
  %v83 = vpack.c.b16 %v68, %v67
  %v84 = vpack.c.b16 %v70, %v69
  %v85 = vpack.c.b16 %v72, %v71
  %v86 = vpack.c.b16 %v74, %v73
  %v87 = vpack.c.b16 %v76, %v75
  %v88 = vpack.c.b16 %v78, %v77
  %v89 = vpack.c.b16 %v80, %v79
  %v90 = vpack.c.b16 %v82, %v81
  %99 = vmatprep.subr.bf16.mxu0 0
  %100 = vmatpush1.bf16.msra.mxu0 %v90
  %101 = vmatprep.subr.bf16.mxu0 0
  %102 = vmatpush1.bf16.msra.mxu0 %v89
  %103 = vmatprep.subr.bf16.mxu0 0
  %104 = vmatpush1.bf16.msra.mxu0 %v88
  %105 = vmatprep.subr.bf16.mxu0 0
  %106 = vmatpush1.bf16.msra.mxu0 %v87
  %107 = vmatprep.subr.bf16.mxu0 0
  %108 = vmatpush1.bf16.msra.mxu0 %v86
  %109 = vmatprep.subr.bf16.mxu0 0
  %110 = vmatpush1.bf16.msra.mxu0 %v85
  %111 = vmatprep.subr.bf16.mxu0 0
  %112 = vmatpush1.bf16.msra.mxu0 %v84
  %113 = vmatprep.subr.bf16.mxu0 0
  %114 = vmatpush1.bf16.msra.mxu0 %v83
  %115 = vmatprep.subr.bf16.mxu0 0
  %116 = vmatpush2.bf16.msra.mxu0 0
  %117 = vmatprep.subr.bf16.mxu0 0
  %118 = vmatpush2.bf16.msra.mxu0 0
  %119 = vmatprep.subr.bf16.mxu0 0
  %120 = vmatpush2.bf16.msra.mxu0 0
  %121 = vmatprep.subr.bf16.mxu0 0
  %122 = vmatpush2.bf16.msra.mxu0 0
  %123 = vmatprep.subr.bf16.mxu0 0
  %124 = vmatpush2.bf16.msra.mxu0 0
  %125 = vmatprep.subr.bf16.mxu0 0
  %126 = vmatpush2.bf16.msra.mxu0 0
  %127 = vmatprep.subr.bf16.mxu0 0
  %128 = vmatpush2.bf16.msra.mxu0 0
  %129 = vmatprep.subr.bf16.mxu0 0
  %130 = vmatpush2.bf16.msra.mxu0 0
  %131 = vmatprep.mubr.bf16.mxu0 0
  %132 = vmatmul.mubr.bf16.gmra.mxu0 %v49
  %v133 = vpop.f32.mrf.mxu0
  %v134 = vadd.f32 0.0, %v133
  %v135 = vpop.f32.mrf.mxu0
  %v136 = vpop.f32.mrf.mxu0
  %v137 = vadd.f32 0.0, %v136
  %v138 = vpop.f32.mrf.mxu0
  %139 = vdwg.mxu0
  %v140 = vadd.f32 %v25, %v134
  %v141 = vadd.f32 %v26, %v137
  %vm142 = vcmask 261120
  %143 = vst.msk [vmem:[#allocation2] sm:$0xff] %vm142, %v140
  %144 = vst.msk [vmem:[#allocation2 + $0x8] sm:$0xff] %vm142, %v141
  // Predicated region
  $region22: #{_lambda_.16} parent=0 // pred_check
    %p145 = pneg %p18
  $region23: #{_lambda_.16} parent=0 // pred_check_branch
    %147 = sbr.rel (%p145) target = $region25
  $region24: #{_lambda_.16} parent=0 // pred_region
    %v148 = vld [vmem:[#allocation2] sm:$0xff]
    %v149 = vld [vmem:[#allocation2 + $0x8] sm:$0xff]
    %v150 = vld [vmem:[%s2] sm:$0xff]
    %v151 = vld [vmem:[%s2 + $0x8] sm:$0xff]
    %153 = vset.pattern.permute.xlu0 0
    %154 = vperm.xlu0 %153, %v150
    %v155 = vpop.permute.xlu0 %154
    %158 = vset.pattern.permute.xlu0 0
    %159 = vperm.xlu0 %158, %v151
    %v160 = vpop.permute.xlu0 %159
    %v162 = vmul.f32 %v148, %v155
    %v163 = vmul.f32 %v149, %v160
    %v164 = vld [vmem:[%s3] sm:$0xff]
    %v165 = vld [vmem:[%s3 + $0x8] sm:$0xff]
    %167 = vset.pattern.permute.xlu0 0
    %168 = vperm.xlu0 %167, %v164
    %v169 = vpop.permute.xlu0 %168
    %172 = vset.pattern.permute.xlu0 0
    %173 = vperm.xlu0 %172, %v165
    %v174 = vpop.permute.xlu0 %173
    %v176 = vadd.f32 %v162, %v169
    %v177 = vadd.f32 %v163, %v174
    %vm178 = vcmp.gt.f32.partialorder %v176, 0.0
    %vm179 = vcmp.gt.f32.partialorder %v177, 0.0
    %v180 = vmul.f32 %v176, 0.2
    %v181 = vmul.f32 %v177, 0.2
    %v182 = vsel %vm178, %v176, %v180
    %v183 = vsel %vm179, %v177, %v181
    %184 = vst.msk [vmem:[%s4] sm:$0xff] %vm142, %v182
    %185 = vst.msk [vmem:[%s4 + $0x8] sm:$0xff] %vm142, %v183
  $region25: #{_lambda_.16} parent=0 // pred_fallthru
    _
  // Predicated region
  $region26: #{_lambda_.16} parent=0 // pred_check
    _
  $region27: #{_lambda_.16} parent=0 // pred_check_branch
    %187 = sbr.rel (0) target = $region29
  $region28: #{_lambda_.16} parent=0 // pred_region
    _
  $region29: #{_lambda_.16} parent=0 // pred_fallthru
    _
  // Predicated region
  $region30: #{_lambda_.16} parent=0 // pred_check
    _
  $region31: #{_lambda_.16} parent=0 // pred_check_branch
    %189 = sbr.rel (0) target = $region33
  $region32: #{_lambda_.16} parent=0 // pred_region
    _
  $region33: #{_lambda_.16} parent=0 // pred_fallthru
    _

// kernel: _lambda_.17
$region0: #{_lambda_.17}
  #allocation0 [shape = 'u32[]', space=smem, size = 0x4, offset = 0x4, fixed_abs, tag = 'smem constant byte address 0x4 - core index']
  #allocation1 [shape = 'u32[144,128]{1,0:T(1,128)}', space=vmem, size = 0x12000, scoped, tag = 'internal scratch']
  #allocation2 [shape = 'f32[8,2]{1,0:T(8,128)}', space=vmem, size = 0x1000, scoped, tag = 'scratch operand']
  %s0 = inlined_call_operand.vmem [shape: bf16[8,256], index: 0, kind: input, shape index: {}]
  %s1 = inlined_call_operand.vmem [shape: bf16[256,2], index: 1, kind: input, shape index: {}]
  %s2 = inlined_call_operand.vmem [shape: f32[8,1], index: 2, kind: input, shape index: {}]
  %s3 = inlined_call_operand.vmem [shape: f32[8,1], index: 3, kind: input, shape index: {}]
  %s4 = inlined_call_operand.vmem [shape: f32[8,2], index: 4, kind: output, shape index: {}]
  %s5 = sld [smem:[#allocation0]]
  $region34: #{_lambda_.17} parent=0
    _
  %s7 = ssub.s32 1, %s5
  %s8 = scalar_select 0, %s7, %s5
  // Predicated region
  $region2: #{_lambda_.17} parent=0 // pred_check
    _
  $region3: #{_lambda_.17} parent=0 // pred_check_branch
    %10 = sbr.rel (0) target = $region5
  $region4: #{_lambda_.17} parent=0 // pred_region
    _
  $region5: #{_lambda_.17} parent=0 // pred_fallthru
    _
  // Predicated region
  $region6: #{_lambda_.17} parent=0 // pred_check
    _
  $region7: #{_lambda_.17} parent=0 // pred_check_branch
    %12 = sbr.rel (0) target = $region9
  $region8: #{_lambda_.17} parent=0 // pred_region
    _
  $region9: #{_lambda_.17} parent=0 // pred_fallthru
    _
  // Predicated region
  $region10: #{_lambda_.17} parent=0 // pred_check
    _
  $region11: #{_lambda_.17} parent=0 // pred_check_branch
    %14 = sbr.rel (0) target = $region13
  $region12: #{_lambda_.17} parent=0 // pred_region
    _
  $region13: #{_lambda_.17} parent=0 // pred_fallthru
    _
  // Predicated region
  $region14: #{_lambda_.17} parent=0 // pred_check
    _
  $region15: #{_lambda_.17} parent=0 // pred_check_branch
    %16 = sbr.rel (0) target = $region17
  $region16: #{_lambda_.17} parent=0 // pred_region
    _
  $region17: #{_lambda_.17} parent=0 // pred_fallthru
    _
  %p18 = scmp.eq.s32.totalorder 0, 0
  // Predicated region
  $region18: #{_lambda_.17} parent=0 // pred_check
    %p19 = pneg %p18
  $region19: #{_lambda_.17} parent=0 // pred_check_branch
    %21 = sbr.rel (%p19) target = $region21
  $region20: #{_lambda_.17} parent=0 // pred_region
    %vm22 = vcmask 15360
    %23 = vst.msk [vmem:[#allocation2] sm:$0xff] %vm22, 0.0
  $region21: #{_lambda_.17} parent=0 // pred_fallthru
    _
  %v24 = vld [vmem:[#allocation2] sm:$0xff]
  %v25 = vld [vmem:[%s0] sm:$0xff]
  %v26 = vld [vmem:[%s1] sm:$0xf]
  %v27 = vld [vmem:[%s1 + $0x4] sm:$0xf]
  %v28 = vld [vmem:[%s1 + $0x8] sm:$0xf]
  %v29 = vld [vmem:[%s1 + $0xc] sm:$0xf]
  %v30 = vld [vmem:[%s1 + $0x10] sm:$0xf]
  %v31 = vld [vmem:[%s1 + $0x14] sm:$0xf]
  %v32 = vld [vmem:[%s1 + $0x18] sm:$0xf]
  %v33 = vld [vmem:[%s1 + $0x1c] sm:$0xf]
  %v34 = vld [vmem:[%s1 + $0x20] sm:$0xf]
  %v35 = vld [vmem:[%s1 + $0x24] sm:$0xf]
  %v36 = vld [vmem:[%s1 + $0x28] sm:$0xf]
  %v37 = vld [vmem:[%s1 + $0x2c] sm:$0xf]
  %v38 = vld [vmem:[%s1 + $0x30] sm:$0xf]
  %v39 = vld [vmem:[%s1 + $0x34] sm:$0xf]
  %v40 = vld [vmem:[%s1 + $0x38] sm:$0xf]
  %v41 = vld [vmem:[%s1 + $0x3c] sm:$0xf]
  %v42 = vld [vmem:[%s1 + $0x40] sm:$0xf]
  %v43 = vld [vmem:[%s1 + $0x44] sm:$0xf]
  %v44 = vld [vmem:[%s1 + $0x48] sm:$0xf]
  %v45 = vld [vmem:[%s1 + $0x4c] sm:$0xf]
  %v46 = vld [vmem:[%s1 + $0x50] sm:$0xf]
  %v47 = vld [vmem:[%s1 + $0x54] sm:$0xf]
  %v48 = vld [vmem:[%s1 + $0x58] sm:$0xf]
  %v49 = vld [vmem:[%s1 + $0x5c] sm:$0xf]
  %v50 = vld [vmem:[%s1 + $0x60] sm:$0xf]
  %v51 = vld [vmem:[%s1 + $0x64] sm:$0xf]
  %v52 = vld [vmem:[%s1 + $0x68] sm:$0xf]
  %v53 = vld [vmem:[%s1 + $0x6c] sm:$0xf]
  %v54 = vld [vmem:[%s1 + $0x70] sm:$0xf]
  %v55 = vld [vmem:[%s1 + $0x74] sm:$0xf]
  %v56 = vld [vmem:[%s1 + $0x78] sm:$0xf]
  %v57 = vld [vmem:[%s1 + $0x7c] sm:$0xf]
  %v59 = vunpack.c.l.b16 %v25
  %v60 = vunpack.c.h.b16 %v25
  %v61 = vpack.c.b16 %v59, %v59
  %v62 = vpack.c.b16 %v60, %v60
  %v97 = vunpack.c.l.b16 %v26
  %v98 = vunpack.c.l.b16 %v27
  %v99 = vunpack.c.l.b16 %v28
  %v100 = vunpack.c.l.b16 %v29
  %v101 = vunpack.c.l.b16 %v30
  %v102 = vunpack.c.l.b16 %v31
  %v103 = vunpack.c.l.b16 %v32
  %v104 = vunpack.c.l.b16 %v33
  %v105 = vunpack.c.l.b16 %v34
  %v106 = vunpack.c.l.b16 %v35
  %v107 = vunpack.c.l.b16 %v36
  %v108 = vunpack.c.l.b16 %v37
  %v109 = vunpack.c.l.b16 %v38
  %v110 = vunpack.c.l.b16 %v39
  %v111 = vunpack.c.l.b16 %v40
  %v112 = vunpack.c.l.b16 %v41
  %v113 = vunpack.c.l.b16 %v42
  %v114 = vunpack.c.l.b16 %v43
  %v115 = vunpack.c.l.b16 %v44
  %v116 = vunpack.c.l.b16 %v45
  %v117 = vunpack.c.l.b16 %v46
  %v118 = vunpack.c.l.b16 %v47
  %v119 = vunpack.c.l.b16 %v48
  %v120 = vunpack.c.l.b16 %v49
  %v121 = vunpack.c.l.b16 %v50
  %v122 = vunpack.c.l.b16 %v51
  %v123 = vunpack.c.l.b16 %v52
  %v124 = vunpack.c.l.b16 %v53
  %v125 = vunpack.c.l.b16 %v54
  %v126 = vunpack.c.l.b16 %v55
  %v127 = vunpack.c.l.b16 %v56
  %v128 = vunpack.c.l.b16 %v57
  %v129 = vpack.c.b16 %v98, %v97
  %v130 = vpack.c.b16 %v100, %v99
  %v131 = vpack.c.b16 %v102, %v101
  %v132 = vpack.c.b16 %v104, %v103
  %v133 = vpack.c.b16 %v106, %v105
  %v134 = vpack.c.b16 %v108, %v107
  %v135 = vpack.c.b16 %v110, %v109
  %v136 = vpack.c.b16 %v112, %v111
  %v137 = vpack.c.b16 %v114, %v113
  %v138 = vpack.c.b16 %v116, %v115
  %v139 = vpack.c.b16 %v118, %v117
  %v140 = vpack.c.b16 %v120, %v119
  %v141 = vpack.c.b16 %v122, %v121
  %v142 = vpack.c.b16 %v124, %v123
  %v143 = vpack.c.b16 %v126, %v125
  %v144 = vpack.c.b16 %v128, %v127
  %161 = vmatprep.subr.bf16.mxu0 0
  %162 = vmatpush1.bf16.msra.mxu0 %v136
  %163 = vmatprep.subr.bf16.mxu0 0
  %164 = vmatpush1.bf16.msra.mxu0 %v135
  %165 = vmatprep.subr.bf16.mxu0 0
  %166 = vmatpush1.bf16.msra.mxu0 %v134
  %167 = vmatprep.subr.bf16.mxu0 0
  %168 = vmatpush1.bf16.msra.mxu0 %v133
  %169 = vmatprep.subr.bf16.mxu0 0
  %170 = vmatpush1.bf16.msra.mxu0 %v132
  %171 = vmatprep.subr.bf16.mxu0 0
  %172 = vmatpush1.bf16.msra.mxu0 %v131
  %173 = vmatprep.subr.bf16.mxu0 0
  %174 = vmatpush1.bf16.msra.mxu0 %v130
  %175 = vmatprep.subr.bf16.mxu0 0
  %176 = vmatpush1.bf16.msra.mxu0 %v129
  %177 = vmatprep.subr.bf16.mxu0 0
  %178 = vmatpush2.bf16.msra.mxu0 %v144
  %179 = vmatprep.subr.bf16.mxu0 0
  %180 = vmatpush2.bf16.msra.mxu0 %v143
  %181 = vmatprep.subr.bf16.mxu0 0
  %182 = vmatpush2.bf16.msra.mxu0 %v142
  %183 = vmatprep.subr.bf16.mxu0 0
  %184 = vmatpush2.bf16.msra.mxu0 %v141
  %185 = vmatprep.subr.bf16.mxu0 0
  %186 = vmatpush2.bf16.msra.mxu0 %v140
  %187 = vmatprep.subr.bf16.mxu0 0
  %188 = vmatpush2.bf16.msra.mxu0 %v139
  %189 = vmatprep.subr.bf16.mxu0 0
  %190 = vmatpush2.bf16.msra.mxu0 %v138
  %191 = vmatprep.subr.bf16.mxu0 0
  %192 = vmatpush2.bf16.msra.mxu0 %v137
  %193 = vmatprep.mubr.bf16.mxu0 %v62
  %194 = vmatmul.mubr.bf16.gmra.mxu0 %v61
  %v195 = vpop.f32.mrf.mxu0
  %v196 = vadd.f32 0.0, %v195
  %v197 = vpop.f32.mrf.mxu0
  %v198 = vpop.f32.mrf.mxu0
  %v199 = vpop.f32.mrf.mxu0
  %200 = vdwg.mxu0
  %v201 = vadd.f32 %v24, %v196
  %vm202 = vcmask 15360
  %203 = vst.msk [vmem:[#allocation2] sm:$0xff] %vm202, %v201
  // Predicated region
  $region22: #{_lambda_.17} parent=0 // pred_check
    %p204 = pneg %p18
  $region23: #{_lambda_.17} parent=0 // pred_check_branch
    %206 = sbr.rel (%p204) target = $region25
  $region24: #{_lambda_.17} parent=0 // pred_region
    %v207 = vld [vmem:[#allocation2] sm:$0xff]
    %208 = vst.msk [vmem:[%s4] sm:$0xff] %vm202, %v207
  $region25: #{_lambda_.17} parent=0 // pred_fallthru
    _
  // Predicated region
  $region26: #{_lambda_.17} parent=0 // pred_check
    _
  $region27: #{_lambda_.17} parent=0 // pred_check_branch
    %210 = sbr.rel (0) target = $region29
  $region28: #{_lambda_.17} parent=0 // pred_region
    _
  $region29: #{_lambda_.17} parent=0 // pred_fallthru
    _
  // Predicated region
  $region30: #{_lambda_.17} parent=0 // pred_check
    _
  $region31: #{_lambda_.17} parent=0 // pred_check_branch
    %212 = sbr.rel (0) target = $region33
  $region32: #{_lambda_.17} parent=0 // pred_region
    _
  $region33: #{_lambda_.17} parent=0 // pred_fallthru
    _

// kernel: _lambda_.21
$region0: #{_lambda_.21}
  #allocation0 [shape = 'u32[]', space=smem, size = 0x4, offset = 0x4, fixed_abs, tag = 'smem constant byte address 0x4 - core index']
  #allocation1 [shape = 'u32[144,128]{1,0:T(1,128)}', space=vmem, size = 0x12000, scoped, tag = 'internal scratch']
  #allocation2 [shape = 'f32[16,32]{1,0:T(8,128)}', space=vmem, size = 0x2000, scoped, tag = 'scratch operand']
  %s0 = inlined_call_operand.vmem [shape: bf16[16,128], index: 0, kind: input, shape index: {}]
  %s1 = inlined_call_operand.vmem [shape: bf16[128,32], index: 1, kind: input, shape index: {}]
  %s2 = inlined_call_operand.vmem [shape: f32[16,1], index: 2, kind: input, shape index: {}]
  %s3 = inlined_call_operand.vmem [shape: f32[16,1], index: 3, kind: input, shape index: {}]
  %s4 = inlined_call_operand.vmem [shape: f32[16,32], index: 4, kind: output, shape index: {}]
  %s5 = sld [smem:[#allocation0]]
  $region34: #{_lambda_.21} parent=0
    _
  %s7 = ssub.s32 1, %s5
  %s8 = scalar_select 0, %s7, %s5
  // Predicated region
  $region2: #{_lambda_.21} parent=0 // pred_check
    _
  $region3: #{_lambda_.21} parent=0 // pred_check_branch
    %10 = sbr.rel (0) target = $region5
  $region4: #{_lambda_.21} parent=0 // pred_region
    _
  $region5: #{_lambda_.21} parent=0 // pred_fallthru
    _
  // Predicated region
  $region6: #{_lambda_.21} parent=0 // pred_check
    _
  $region7: #{_lambda_.21} parent=0 // pred_check_branch
    %12 = sbr.rel (0) target = $region9
  $region8: #{_lambda_.21} parent=0 // pred_region
    _
  $region9: #{_lambda_.21} parent=0 // pred_fallthru
    _
  // Predicated region
  $region10: #{_lambda_.21} parent=0 // pred_check
    _
  $region11: #{_lambda_.21} parent=0 // pred_check_branch
    %14 = sbr.rel (0) target = $region13
  $region12: #{_lambda_.21} parent=0 // pred_region
    _
  $region13: #{_lambda_.21} parent=0 // pred_fallthru
    _
  // Predicated region
  $region14: #{_lambda_.21} parent=0 // pred_check
    _
  $region15: #{_lambda_.21} parent=0 // pred_check_branch
    %16 = sbr.rel (0) target = $region17
  $region16: #{_lambda_.21} parent=0 // pred_region
    _
  $region17: #{_lambda_.21} parent=0 // pred_fallthru
    _
  %p18 = scmp.eq.s32.totalorder 0, 0
  // Predicated region
  $region18: #{_lambda_.21} parent=0 // pred_check
    %p19 = pneg %p18
  $region19: #{_lambda_.21} parent=0 // pred_check_branch
    %21 = sbr.rel (%p19) target = $region21
  $region20: #{_lambda_.21} parent=0 // pred_region
    %vm22 = vcmask 261120
    %23 = vst.msk [vmem:[#allocation2] sm:$0xff] %vm22, 0.0
    %24 = vst.msk [vmem:[#allocation2 + $0x8] sm:$0xff] %vm22, 0.0
  $region21: #{_lambda_.21} parent=0 // pred_fallthru
    _
  %v25 = vld [vmem:[#allocation2] sm:$0xff]
  %v26 = vld [vmem:[#allocation2 + $0x8] sm:$0xff]
  %v27 = vld [vmem:[%s0] sm:$0xf]
  %v28 = vld [vmem:[%s0 + $0x4] sm:$0xf]
  %v29 = vld [vmem:[%s1] sm:$0xf]
  %v30 = vld [vmem:[%s1 + $0x4] sm:$0xf]
  %v31 = vld [vmem:[%s1 + $0x8] sm:$0xf]
  %v32 = vld [vmem:[%s1 + $0xc] sm:$0xf]
  %v33 = vld [vmem:[%s1 + $0x10] sm:$0xf]
  %v34 = vld [vmem:[%s1 + $0x14] sm:$0xf]
  %v35 = vld [vmem:[%s1 + $0x18] sm:$0xf]
  %v36 = vld [vmem:[%s1 + $0x1c] sm:$0xf]
  %v37 = vld [vmem:[%s1 + $0x20] sm:$0xf]
  %v38 = vld [vmem:[%s1 + $0x24] sm:$0xf]
  %v39 = vld [vmem:[%s1 + $0x28] sm:$0xf]
  %v40 = vld [vmem:[%s1 + $0x2c] sm:$0xf]
  %v41 = vld [vmem:[%s1 + $0x30] sm:$0xf]
  %v42 = vld [vmem:[%s1 + $0x34] sm:$0xf]
  %v43 = vld [vmem:[%s1 + $0x38] sm:$0xf]
  %v44 = vld [vmem:[%s1 + $0x3c] sm:$0xf]
  %v47 = vunpack.c.l.b16 %v27
  %v48 = vunpack.c.l.b16 %v28
  %v49 = vpack.c.b16 %v48, %v47
  %v67 = vunpack.c.l.b16 %v29
  %v68 = vunpack.c.l.b16 %v30
  %v69 = vunpack.c.l.b16 %v31
  %v70 = vunpack.c.l.b16 %v32
  %v71 = vunpack.c.l.b16 %v33
  %v72 = vunpack.c.l.b16 %v34
  %v73 = vunpack.c.l.b16 %v35
  %v74 = vunpack.c.l.b16 %v36
  %v75 = vunpack.c.l.b16 %v37
  %v76 = vunpack.c.l.b16 %v38
  %v77 = vunpack.c.l.b16 %v39
  %v78 = vunpack.c.l.b16 %v40
  %v79 = vunpack.c.l.b16 %v41
  %v80 = vunpack.c.l.b16 %v42
  %v81 = vunpack.c.l.b16 %v43
  %v82 = vunpack.c.l.b16 %v44
  %v83 = vpack.c.b16 %v68, %v67
  %v84 = vpack.c.b16 %v70, %v69
  %v85 = vpack.c.b16 %v72, %v71
  %v86 = vpack.c.b16 %v74, %v73
  %v87 = vpack.c.b16 %v76, %v75
  %v88 = vpack.c.b16 %v78, %v77
  %v89 = vpack.c.b16 %v80, %v79
  %v90 = vpack.c.b16 %v82, %v81
  %99 = vmatprep.subr.bf16.mxu0 0
  %100 = vmatpush1.bf16.msra.mxu0 %v90
  %101 = vmatprep.subr.bf16.mxu0 0
  %102 = vmatpush1.bf16.msra.mxu0 %v89
  %103 = vmatprep.subr.bf16.mxu0 0
  %104 = vmatpush1.bf16.msra.mxu0 %v88
  %105 = vmatprep.subr.bf16.mxu0 0
  %106 = vmatpush1.bf16.msra.mxu0 %v87
  %107 = vmatprep.subr.bf16.mxu0 0
  %108 = vmatpush1.bf16.msra.mxu0 %v86
  %109 = vmatprep.subr.bf16.mxu0 0
  %110 = vmatpush1.bf16.msra.mxu0 %v85
  %111 = vmatprep.subr.bf16.mxu0 0
  %112 = vmatpush1.bf16.msra.mxu0 %v84
  %113 = vmatprep.subr.bf16.mxu0 0
  %114 = vmatpush1.bf16.msra.mxu0 %v83
  %115 = vmatprep.subr.bf16.mxu0 0
  %116 = vmatpush2.bf16.msra.mxu0 0
  %117 = vmatprep.subr.bf16.mxu0 0
  %118 = vmatpush2.bf16.msra.mxu0 0
  %119 = vmatprep.subr.bf16.mxu0 0
  %120 = vmatpush2.bf16.msra.mxu0 0
  %121 = vmatprep.subr.bf16.mxu0 0
  %122 = vmatpush2.bf16.msra.mxu0 0
  %123 = vmatprep.subr.bf16.mxu0 0
  %124 = vmatpush2.bf16.msra.mxu0 0
  %125 = vmatprep.subr.bf16.mxu0 0
  %126 = vmatpush2.bf16.msra.mxu0 0
  %127 = vmatprep.subr.bf16.mxu0 0
  %128 = vmatpush2.bf16.msra.mxu0 0
  %129 = vmatprep.subr.bf16.mxu0 0
  %130 = vmatpush2.bf16.msra.mxu0 0
  %131 = vmatprep.mubr.bf16.mxu0 0
  %132 = vmatmul.mubr.bf16.gmra.mxu0 %v49
  %v133 = vpop.f32.mrf.mxu0
  %v134 = vadd.f32 0.0, %v133
  %v135 = vpop.f32.mrf.mxu0
  %v136 = vpop.f32.mrf.mxu0
  %v137 = vadd.f32 0.0, %v136
  %v138 = vpop.f32.mrf.mxu0
  %139 = vdwg.mxu0
  %v140 = vadd.f32 %v25, %v134
  %v141 = vadd.f32 %v26, %v137
  %vm142 = vcmask 261120
  %143 = vst.msk [vmem:[#allocation2] sm:$0xff] %vm142, %v140
  %144 = vst.msk [vmem:[#allocation2 + $0x8] sm:$0xff] %vm142, %v141
  // Predicated region
  $region22: #{_lambda_.21} parent=0 // pred_check
    %p145 = pneg %p18
  $region23: #{_lambda_.21} parent=0 // pred_check_branch
    %147 = sbr.rel (%p145) target = $region25
  $region24: #{_lambda_.21} parent=0 // pred_region
    %v148 = vld [vmem:[#allocation2] sm:$0xff]
    %v149 = vld [vmem:[#allocation2 + $0x8] sm:$0xff]
    %v150 = vld [vmem:[%s2] sm:$0xff]
    %v151 = vld [vmem:[%s2 + $0x8] sm:$0xff]
    %153 = vset.pattern.permute.xlu0 0
    %154 = vperm.xlu0 %153, %v150
    %v155 = vpop.permute.xlu0 %154
    %158 = vset.pattern.permute.xlu0 0
    %159 = vperm.xlu0 %158, %v151
    %v160 = vpop.permute.xlu0 %159
    %v162 = vmul.f32 %v148, %v155
    %v163 = vmul.f32 %v149, %v160
    %v164 = vld [vmem:[%s3] sm:$0xff]
    %v165 = vld [vmem:[%s3 + $0x8] sm:$0xff]
    %167 = vset.pattern.permute.xlu0 0
    %168 = vperm.xlu0 %167, %v164
    %v169 = vpop.permute.xlu0 %168
    %172 = vset.pattern.permute.xlu0 0
    %173 = vperm.xlu0 %172, %v165
    %v174 = vpop.permute.xlu0 %173
    %v176 = vadd.f32 %v162, %v169
    %v177 = vadd.f32 %v163, %v174
    %v178 = vmax.f32 %v176, 0.0
    %v179 = vmax.f32 %v177, 0.0
    %180 = vst.msk [vmem:[%s4] sm:$0xff] %vm142, %v178
    %181 = vst.msk [vmem:[%s4 + $0x8] sm:$0xff] %vm142, %v179
  $region25: #{_lambda_.21} parent=0 // pred_fallthru
    _
  // Predicated region
  $region26: #{_lambda_.21} parent=0 // pred_check
    _
  $region27: #{_lambda_.21} parent=0 // pred_check_branch
    %183 = sbr.rel (0) target = $region29
  $region28: #{_lambda_.21} parent=0 // pred_region
    _
  $region29: #{_lambda_.21} parent=0 // pred_fallthru
    _
  // Predicated region
  $region30: #{_lambda_.21} parent=0 // pred_check
    _
  $region31: #{_lambda_.21} parent=0 // pred_check_branch
    %185 = sbr.rel (0) target = $region33
  $region32: #{_lambda_.21} parent=0 // pred_region
    _
  $region33: #{_lambda_.21} parent=0 // pred_fallthru
    _

// kernel: _lambda_.23
$region0: #{_lambda_.23}
  #allocation0 [shape = 'u32[]', space=smem, size = 0x4, offset = 0x4, fixed_abs, tag = 'smem constant byte address 0x4 - core index']
  #allocation1 [shape = 'u32[144,128]{1,0:T(1,128)}', space=vmem, size = 0x12000, scoped, tag = 'internal scratch']
  #allocation2 [shape = 'f32[12,162]{1,0:T(8,128)}', space=vmem, size = 0x4000, scoped, tag = 'scratch operand']
  %s0 = inlined_call_operand.vmem [shape: bf16[12,32], index: 0, kind: input, shape index: {}]
  %s1 = inlined_call_operand.vmem [shape: bf16[32,162], index: 1, kind: input, shape index: {}]
  %s2 = inlined_call_operand.vmem [shape: f32[12,1], index: 2, kind: input, shape index: {}]
  %s3 = inlined_call_operand.vmem [shape: f32[12,1], index: 3, kind: input, shape index: {}]
  %s4 = inlined_call_operand.vmem [shape: f32[12,162], index: 4, kind: output, shape index: {}]
  %s5 = sld [smem:[#allocation0]]
  $region34: #{_lambda_.23} parent=0
    _
  %s7 = ssub.s32 1, %s5
  %s8 = scalar_select 0, %s7, %s5
  // Predicated region
  $region2: #{_lambda_.23} parent=0 // pred_check
    _
  $region3: #{_lambda_.23} parent=0 // pred_check_branch
    %10 = sbr.rel (0) target = $region5
  $region4: #{_lambda_.23} parent=0 // pred_region
    _
  $region5: #{_lambda_.23} parent=0 // pred_fallthru
    _
  // Predicated region
  $region6: #{_lambda_.23} parent=0 // pred_check
    _
  $region7: #{_lambda_.23} parent=0 // pred_check_branch
    %12 = sbr.rel (0) target = $region9
  $region8: #{_lambda_.23} parent=0 // pred_region
    _
  $region9: #{_lambda_.23} parent=0 // pred_fallthru
    _
  // Predicated region
  $region10: #{_lambda_.23} parent=0 // pred_check
    _
  $region11: #{_lambda_.23} parent=0 // pred_check_branch
    %14 = sbr.rel (0) target = $region13
  $region12: #{_lambda_.23} parent=0 // pred_region
    _
  $region13: #{_lambda_.23} parent=0 // pred_fallthru
    _
  // Predicated region
  $region14: #{_lambda_.23} parent=0 // pred_check
    _
  $region15: #{_lambda_.23} parent=0 // pred_check_branch
    %16 = sbr.rel (0) target = $region17
  $region16: #{_lambda_.23} parent=0 // pred_region
    _
  $region17: #{_lambda_.23} parent=0 // pred_fallthru
    _
  %p18 = scmp.eq.s32.totalorder 0, 0
  // Predicated region
  $region18: #{_lambda_.23} parent=0 // pred_check
    %p19 = pneg %p18
  $region19: #{_lambda_.23} parent=0 // pred_check_branch
    %21 = sbr.rel (%p19) target = $region21
  $region20: #{_lambda_.23} parent=0 // pred_region
    %22 = vst [vmem:[#allocation2] sm:$0xff] 0.0
    %vm23 = vcmask 277504
    %24 = vst.msk [vmem:[#allocation2 + $0x8] sm:$0xff] %vm23, 0.0
    %25 = vst [vmem:[#allocation2 + $0x10] sm:$0xf] 0.0
    %vm26 = vcmask 273408
    %27 = vst.msk [vmem:[#allocation2 + $0x18] sm:$0xf] %vm26, 0.0
  $region21: #{_lambda_.23} parent=0 // pred_fallthru
    _
  %v28 = vld [vmem:[#allocation2] sm:$0xff]
  %v29 = vld [vmem:[#allocation2 + $0x8] sm:$0xff]
  %v30 = vld [vmem:[#allocation2 + $0x10] sm:$0xf]
  %v31 = vld [vmem:[#allocation2 + $0x18] sm:$0xf]
  %v32 = vld [vmem:[%s0] sm:$0xf]
  %v33 = vld [vmem:[%s0 + $0x4] sm:$0x3]
  %v34 = vld [vmem:[%s1] sm:$0xff]
  %v35 = vld [vmem:[%s1 + $0x8] sm:$0xff]
  %v36 = vld [vmem:[%s1 + $0x10] sm:$0xff]
  %v37 = vld [vmem:[%s1 + $0x18] sm:$0xff]
  %v40 = vunpack.c.l.b16 %v32
  %v41 = vunpack.c.l.b16 %v33
  %v42 = vpack.c.b16 %v41, %v40
  %v47 = vunpack.c.l.b16 %v34
  %v48 = vunpack.c.h.b16 %v34
  %v49 = vunpack.c.l.b16 %v35
  %v50 = vunpack.c.h.b16 %v35
  %v51 = vunpack.c.l.b16 %v36
  %v52 = vunpack.c.h.b16 %v36
  %v53 = vunpack.c.l.b16 %v37
  %v54 = vunpack.c.h.b16 %v37
  %v55 = vpack.c.b16 %v49, %v47
  %v56 = vpack.c.b16 %v50, %v48
  %v57 = vpack.c.b16 %v53, %v51
  %v58 = vpack.c.b16 %v54, %v52
  %vm63 = vcmask 261120
  %v65 = vsel %vm63, %v42, 0
  %67 = vmatprep.subr.bf16.mxu0 0
  %68 = vmatpush1.bf16.msra.mxu0 0
  %69 = vmatprep.subr.bf16.mxu0 0
  %70 = vmatpush1.bf16.msra.mxu0 0
  %71 = vmatprep.subr.bf16.mxu0 0
  %72 = vmatpush1.bf16.msra.mxu0 0
  %73 = vmatprep.subr.bf16.mxu0 0
  %74 = vmatpush1.bf16.msra.mxu0 0
  %75 = vmatprep.subr.bf16.mxu0 0
  %76 = vmatpush1.bf16.msra.mxu0 0
  %77 = vmatprep.subr.bf16.mxu0 0
  %78 = vmatpush1.bf16.msra.mxu0 0
  %79 = vmatprep.subr.bf16.mxu0 %v58
  %80 = vmatpush1.bf16.msra.mxu0 %v57
  %81 = vmatprep.subr.bf16.mxu0 %v56
  %82 = vmatpush1.bf16.msra.mxu0 %v55
  %83 = vmatprep.subr.bf16.mxu0 0
  %84 = vmatpush2.bf16.msra.mxu0 0
  %85 = vmatprep.subr.bf16.mxu0 0
  %86 = vmatpush2.bf16.msra.mxu0 0
  %87 = vmatprep.subr.bf16.mxu0 0
  %88 = vmatpush2.bf16.msra.mxu0 0
  %89 = vmatprep.subr.bf16.mxu0 0
  %90 = vmatpush2.bf16.msra.mxu0 0
  %91 = vmatprep.subr.bf16.mxu0 0
  %92 = vmatpush2.bf16.msra.mxu0 0
  %93 = vmatprep.subr.bf16.mxu0 0
  %94 = vmatpush2.bf16.msra.mxu0 0
  %95 = vmatprep.subr.bf16.mxu0 0
  %96 = vmatpush2.bf16.msra.mxu0 0
  %97 = vmatprep.subr.bf16.mxu0 0
  %98 = vmatpush2.bf16.msra.mxu0 0
  %99 = vmatprep.mubr.bf16.mxu0 0
  %100 = vmatmul.mubr.bf16.gmra.mxu0 %v65
  %v101 = vpop.f32.mrf.mxu0
  %v102 = vadd.f32 0.0, %v101
  %v103 = vpop.f32.mrf.mxu0
  %v104 = vadd.f32 0.0, %v103
  %v105 = vpop.f32.mrf.mxu0
  %v106 = vadd.f32 0.0, %v105
  %v107 = vpop.f32.mrf.mxu0
  %v108 = vadd.f32 0.0, %v107
  %109 = vdwg.mxu0
  %v110 = vadd.f32 %v28, %v102
  %v111 = vadd.f32 %v29, %v104
  %v112 = vadd.f32 %v30, %v106
  %v113 = vadd.f32 %v31, %v108
  %114 = vst [vmem:[#allocation2] sm:$0xff] %v110
  %vm115 = vcmask 277504
  %116 = vst.msk [vmem:[#allocation2 + $0x8] sm:$0xff] %vm115, %v111
  %117 = vst [vmem:[#allocation2 + $0x10] sm:$0xf] %v112
  %vm118 = vcmask 273408
  %119 = vst.msk [vmem:[#allocation2 + $0x18] sm:$0xf] %vm118, %v113
  // Predicated region
  $region22: #{_lambda_.23} parent=0 // pred_check
    %p120 = pneg %p18
  $region23: #{_lambda_.23} parent=0 // pred_check_branch
    %122 = sbr.rel (%p120) target = $region25
  $region24: #{_lambda_.23} parent=0 // pred_region
    %v123 = vld [vmem:[#allocation2] sm:$0xff]
    %v124 = vld [vmem:[#allocation2 + $0x8] sm:$0xff]
    %v125 = vld [vmem:[#allocation2 + $0x10] sm:$0xf]
    %v126 = vld [vmem:[#allocation2 + $0x18] sm:$0xf]
    %v127 = vtanh.pop %v123
    %v128 = vtanh.pop %v124
    %v129 = vtanh.pop %v125
    %v130 = vtanh.pop %v126
    %131 = vst [vmem:[%s4] sm:$0xff] %v127
    %132 = vst.msk [vmem:[%s4 + $0x8] sm:$0xff] %vm115, %v128
    %133 = vst [vmem:[%s4 + $0x10] sm:$0xf] %v129
    %134 = vst.msk [vmem:[%s4 + $0x18] sm:$0xf] %vm118, %v130
  $region25: #{_lambda_.23} parent=0 // pred_fallthru
    _
  // Predicated region
  $region26: #{_lambda_.23} parent=0 // pred_check
    _
  $region27: #{_lambda_.23} parent=0 // pred_check_branch
    %136 = sbr.rel (0) target = $region29
  $region28: #{_lambda_.23} parent=0 // pred_region
    _
  $region29: #{_lambda_.23} parent=0 // pred_fallthru
    _
  // Predicated region
  $region30: #{_lambda_.23} parent=0 // pred_check
    _
  $region31: #{_lambda_.23} parent=0 // pred_check_branch
    %138 = sbr.rel (0) target = $region33
  $region32: #{_lambda_.23} parent=0 // pred_region
    _
  $region33: #{_lambda_.23} parent=0 // pred_fallthru
    _

// kernel: _lambda_.20
$region0: #{_lambda_.20}
  #allocation0 [shape = 'u32[]', space=smem, size = 0x4, offset = 0x4, fixed_abs, tag = 'smem constant byte address 0x4 - core index']
  #allocation1 [shape = 'u32[144,128]{1,0:T(1,128)}', space=vmem, size = 0x12000, scoped, tag = 'internal scratch']
  #allocation2 [shape = 'f32[8,162]{1,0:T(8,128)}', space=vmem, size = 0x2000, scoped, tag = 'scratch operand']
  %s0 = inlined_call_operand.vmem [shape: bf16[8,32], index: 0, kind: input, shape index: {}]
  %s1 = inlined_call_operand.vmem [shape: bf16[32,162], index: 1, kind: input, shape index: {}]
  %s2 = inlined_call_operand.vmem [shape: f32[8,1], index: 2, kind: input, shape index: {}]
  %s3 = inlined_call_operand.vmem [shape: f32[8,1], index: 3, kind: input, shape index: {}]
  %s4 = inlined_call_operand.vmem [shape: f32[8,162], index: 4, kind: output, shape index: {}]
  %s5 = sld [smem:[#allocation0]]
  $region34: #{_lambda_.20} parent=0
    _
  %s7 = ssub.s32 1, %s5
  %s8 = scalar_select 0, %s7, %s5
  // Predicated region
  $region2: #{_lambda_.20} parent=0 // pred_check
    _
  $region3: #{_lambda_.20} parent=0 // pred_check_branch
    %10 = sbr.rel (0) target = $region5
  $region4: #{_lambda_.20} parent=0 // pred_region
    _
  $region5: #{_lambda_.20} parent=0 // pred_fallthru
    _
  // Predicated region
  $region6: #{_lambda_.20} parent=0 // pred_check
    _
  $region7: #{_lambda_.20} parent=0 // pred_check_branch
    %12 = sbr.rel (0) target = $region9
  $region8: #{_lambda_.20} parent=0 // pred_region
    _
  $region9: #{_lambda_.20} parent=0 // pred_fallthru
    _
  // Predicated region
  $region10: #{_lambda_.20} parent=0 // pred_check
    _
  $region11: #{_lambda_.20} parent=0 // pred_check_branch
    %14 = sbr.rel (0) target = $region13
  $region12: #{_lambda_.20} parent=0 // pred_region
    _
  $region13: #{_lambda_.20} parent=0 // pred_fallthru
    _
  // Predicated region
  $region14: #{_lambda_.20} parent=0 // pred_check
    _
  $region15: #{_lambda_.20} parent=0 // pred_check_branch
    %16 = sbr.rel (0) target = $region17
  $region16: #{_lambda_.20} parent=0 // pred_region
    _
  $region17: #{_lambda_.20} parent=0 // pred_fallthru
    _
  %p18 = scmp.eq.s32.totalorder 0, 0
  // Predicated region
  $region18: #{_lambda_.20} parent=0 // pred_check
    %p19 = pneg %p18
  $region19: #{_lambda_.20} parent=0 // pred_check_branch
    %21 = sbr.rel (%p19) target = $region21
  $region20: #{_lambda_.20} parent=0 // pred_region
    %22 = vst [vmem:[#allocation2] sm:$0xff] 0.0
    %vm23 = vcmask 277504
    %24 = vst.msk [vmem:[#allocation2 + $0x8] sm:$0xff] %vm23, 0.0
  $region21: #{_lambda_.20} parent=0 // pred_fallthru
    _
  %v25 = vld [vmem:[#allocation2] sm:$0xff]
  %v26 = vld [vmem:[#allocation2 + $0x8] sm:$0xff]
  %v27 = vld [vmem:[%s0] sm:$0xf]
  %v28 = vld [vmem:[%s1] sm:$0xff]
  %v29 = vld [vmem:[%s1 + $0x8] sm:$0xff]
  %v30 = vld [vmem:[%s1 + $0x10] sm:$0xff]
  %v31 = vld [vmem:[%s1 + $0x18] sm:$0xff]
  %v36 = vunpack.c.l.b16 %v28
  %v37 = vunpack.c.h.b16 %v28
  %v38 = vunpack.c.l.b16 %v29
  %v39 = vunpack.c.h.b16 %v29
  %v40 = vunpack.c.l.b16 %v30
  %v41 = vunpack.c.h.b16 %v30
  %v42 = vunpack.c.l.b16 %v31
  %v43 = vunpack.c.h.b16 %v31
  %v44 = vpack.c.b16 %v38, %v36
  %v45 = vpack.c.b16 %v39, %v37
  %v46 = vpack.c.b16 %v42, %v40
  %v47 = vpack.c.b16 %v43, %v41
  %vm52 = vcmask 261120
  %v54 = vsel %vm52, %v27, 0
  %56 = vmatprep.subr.bf16.mxu0 0
  %57 = vmatpush1.bf16.msra.mxu0 0
  %58 = vmatprep.subr.bf16.mxu0 0
  %59 = vmatpush1.bf16.msra.mxu0 0
  %60 = vmatprep.subr.bf16.mxu0 0
  %61 = vmatpush1.bf16.msra.mxu0 0
  %62 = vmatprep.subr.bf16.mxu0 0
  %63 = vmatpush1.bf16.msra.mxu0 0
  %64 = vmatprep.subr.bf16.mxu0 0
  %65 = vmatpush1.bf16.msra.mxu0 0
  %66 = vmatprep.subr.bf16.mxu0 0
  %67 = vmatpush1.bf16.msra.mxu0 0
  %68 = vmatprep.subr.bf16.mxu0 %v47
  %69 = vmatpush1.bf16.msra.mxu0 %v46
  %70 = vmatprep.subr.bf16.mxu0 %v45
  %71 = vmatpush1.bf16.msra.mxu0 %v44
  %72 = vmatprep.subr.bf16.mxu0 0
  %73 = vmatpush2.bf16.msra.mxu0 0
  %74 = vmatprep.subr.bf16.mxu0 0
  %75 = vmatpush2.bf16.msra.mxu0 0
  %76 = vmatprep.subr.bf16.mxu0 0
  %77 = vmatpush2.bf16.msra.mxu0 0
  %78 = vmatprep.subr.bf16.mxu0 0
  %79 = vmatpush2.bf16.msra.mxu0 0
  %80 = vmatprep.subr.bf16.mxu0 0
  %81 = vmatpush2.bf16.msra.mxu0 0
  %82 = vmatprep.subr.bf16.mxu0 0
  %83 = vmatpush2.bf16.msra.mxu0 0
  %84 = vmatprep.subr.bf16.mxu0 0
  %85 = vmatpush2.bf16.msra.mxu0 0
  %86 = vmatprep.subr.bf16.mxu0 0
  %87 = vmatpush2.bf16.msra.mxu0 0
  %88 = vmatprep.mubr.bf16.mxu0 0
  %89 = vmatmul.mubr.bf16.gmra.mxu0 %v54
  %v90 = vpop.f32.mrf.mxu0
  %v91 = vadd.f32 0.0, %v90
  %v92 = vpop.f32.mrf.mxu0
  %v93 = vadd.f32 0.0, %v92
  %v94 = vpop.f32.mrf.mxu0
  %v95 = vpop.f32.mrf.mxu0
  %96 = vdwg.mxu0
  %v97 = vadd.f32 %v25, %v91
  %v98 = vadd.f32 %v26, %v93
  %99 = vst [vmem:[#allocation2] sm:$0xff] %v97
  %vm100 = vcmask 277504
  %101 = vst.msk [vmem:[#allocation2 + $0x8] sm:$0xff] %vm100, %v98
  // Predicated region
  $region22: #{_lambda_.20} parent=0 // pred_check
    %p102 = pneg %p18
  $region23: #{_lambda_.20} parent=0 // pred_check_branch
    %104 = sbr.rel (%p102) target = $region25
  $region24: #{_lambda_.20} parent=0 // pred_region
    %v105 = vld [vmem:[#allocation2] sm:$0xff]
    %v106 = vld [vmem:[#allocation2 + $0x8] sm:$0xff]
    %v107 = vtanh.pop %v105
    %v108 = vtanh.pop %v106
    %109 = vst [vmem:[%s4] sm:$0xff] %v107
    %110 = vst.msk [vmem:[%s4 + $0x8] sm:$0xff] %vm100, %v108
  $region25: #{_lambda_.20} parent=0 // pred_fallthru
    _
  // Predicated region
  $region26: #{_lambda_.20} parent=0 // pred_check
    _
  $region27: #{_lambda_.20} parent=0 // pred_check_branch
    %112 = sbr.rel (0) target = $region29
  $region28: #{_lambda_.20} parent=0 // pred_region
    _
  $region29: #{_lambda_.20} parent=0 // pred_fallthru
    _
  // Predicated region
  $region30: #{_lambda_.20} parent=0 // pred_check
    _
  $region31: #{_lambda_.20} parent=0 // pred_check_branch
    %114 = sbr.rel (0) target = $region33
  $region32: #{_lambda_.20} parent=0 // pred_region
    _
  $region33: #{_lambda_.20} parent=0 // pred_fallthru
    _

</llo_original>
